<compile_context>
chip_gen: v5e
topology: v5e:2x2
jax: 0.10.0
libtpu: 0.0.40
codegen_flags: <defaults>
</compile_context>

<pallas_src>
import functools

import jax
import jax.numpy as jnp
import numpy as np
from jax import lax
from jax.experimental import pallas as pl
from jax.experimental.pallas import tpu as pltpu

LRELU_SLOPE = 0.2
EPS = 1e-5
VMEM_LIMIT = 32 * 1024 * 1024  # safe on v5e/v6e (128 MiB) and v7x (64 MiB)
S_REAL = 49                    # 7x7 spatial positions after conv2
S_PAD = 56                     # padded to a sublane multiple -> tile-aligned blocks


# ---------------------------------------------------------------------------
# Kernel 1: conv1 GEMM (im2col rows) + fused LeakyReLU(0.2)
# ---------------------------------------------------------------------------
def _conv1_kernel(p_ref, w_ref, o_ref):
    """(tm, 16) bf16 @ (16, 64) bf16 -> f32 accum, LeakyReLU, bf16 out."""
    y = jnp.dot(p_ref[...], w_ref[...], preferred_element_type=jnp.float32)
    y = jnp.where(y > 0, y, LRELU_SLOPE * y)
    o_ref[...] = y.astype(o_ref.dtype)


def conv1_matmul(patches, w):
    M, K = patches.shape
    _, N = w.shape
    tm = M if M <= 1024 else 1024  # 1024 % 16 == 0 (bf16 tile-safe); else full dim
    return pl.pallas_call(
        _conv1_kernel,
        out_shape=jax.ShapeDtypeStruct((M, N), jnp.bfloat16),
        grid=(pl.cdiv(M, tm),),
        in_specs=[
            pl.BlockSpec((tm, K), lambda i: (i, 0)),
            pl.BlockSpec((K, N), lambda i: (0, 0)),  # weight stays VMEM-resident
        ],
        out_specs=pl.BlockSpec((tm, N), lambda i: (i, 0)),
        compiler_params=pltpu.CompilerParams(
            dimension_semantics=("parallel",),
            vmem_limit_bytes=VMEM_LIMIT,
        ),
    )(patches, w)


# ---------------------------------------------------------------------------
# Kernel 2: fused conv2-GEMM + InstanceNorm(affine) + LeakyReLU + 7x7 head conv
# ---------------------------------------------------------------------------
def _tail_kernel(p_ref, w2_ref, g_ref, b_ref, w3_ref, o_ref, *, tb):
    """Per batch tile.

    p_ref : (tb*56, 1024) bf16  conv2 im2col patches (rows 49..55 per image are zero)
    w2_ref: (1024, 128)   bf16  conv2 weight, (kh,kw,ic) x oc
    g_ref : (1, 128)      f32   IN gamma (lane broadcast)
    b_ref : (1, 128)      f32   IN beta  (lane broadcast)
    w3_ref: (56, 128)     f32   head conv weight (rows 49..55 zero), (h*7+w) x c
    o_ref : (tb, 128)     f32   per-channel partial sums of the head conv
    """
    # One MXU matmul for the whole batch tile; C=128 on lanes.
    s = jnp.dot(p_ref[...], w2_ref[...], preferred_element_type=jnp.float32)
    s = s.reshape(tb, S_PAD, 128)  # 56 % 8 == 0 -> tile-aligned, no relayout

    # InstanceNorm2d(affine=True): biased per-channel stats over the 49 real rows.
    # Padded rows of s are exactly zero, so sums over 56 rows equal sums over 49.
    mean = jnp.sum(s, axis=1, keepdims=True) * (1.0 / S_REAL)          # (tb,1,128)
    meansq = jnp.sum(s * s, axis=1, keepdims=True) * (1.0 / S_REAL)    # (tb,1,128)
    var = jnp.maximum(meansq - mean * mean, 0.0)
    inv = lax.rsqrt(var + EPS)
    y = (s - mean) * inv * g_ref[...][None] + b_ref[...][None]
    y = jnp.where(y > 0, y, LRELU_SLOPE * y)                           # LeakyReLU(0.2)

    # 7x7 valid conv (OC=1): per-channel partial sums; padded w3 rows are zero.
    o_ref[...] = jnp.sum(y * w3_ref[...][None], axis=1)                # (tb, 128)


def fused_tail(patches2, w2m, gamma, beta, w3m, tb):
    Mrows, K2 = patches2.shape
    B = Mrows // S_PAD
    C = w2m.shape[1]
    return pl.pallas_call(
        functools.partial(_tail_kernel, tb=tb),
        out_shape=jax.ShapeDtypeStruct((B, C), jnp.float32),
        grid=(B // tb,),
        in_specs=[
            pl.BlockSpec((tb * S_PAD, K2), lambda i: (i, 0)),
            pl.BlockSpec((K2, C), lambda i: (0, 0)),   # weights resident across tiles
            pl.BlockSpec((1, C), lambda i: (0, 0)),
            pl.BlockSpec((1, C), lambda i: (0, 0)),
            pl.BlockSpec((S_PAD, C), lambda i: (0, 0)),
        ],
        out_specs=pl.BlockSpec((tb, C), lambda i: (i, 0)),
        compiler_params=pltpu.CompilerParams(
            dimension_semantics=("parallel",),
            vmem_limit_bytes=VMEM_LIMIT,
        ),
    )(patches2, w2m, gamma, beta, w3m)


# ---------------------------------------------------------------------------
# Forward pass (wrapper does only cheap NHWC im2col / reshapes, bf16 casts)
# ---------------------------------------------------------------------------
def discriminator_forward(x, params):
    w1, w2, gamma, beta, w3 = params
    B = x.shape[0]

    # --- Conv2d(1, 64, 4, 2, 1) + LeakyReLU : im2col (K=16, tiny) + tiled GEMM ---
    xp = jnp.pad(x[:, 0], ((0, 0), (1, 1), (1, 1))).astype(jnp.bfloat16)   # (B,30,30)
    cols = [xp[:, i::2, j::2][:, :14, :14] for i in range(4) for j in range(4)]
    patches1 = jnp.stack(cols, axis=-1).reshape(B * 196, 16)  # rows=(b,ho,wo), cols=(kh,kw)
    w1m = w1.reshape(64, 16).T.astype(jnp.bfloat16)           # (16, 64)
    y1 = conv1_matmul(patches1, w1m).reshape(B, 14, 14, 64)   # NHWC bf16, no transpose

    # --- conv2 im2col in NHWC (bf16), cols ordered (kh, kw, ic), S padded 49->56 ---
    y1p = jnp.pad(y1, ((0, 0), (1, 1), (1, 1), (0, 0)))                    # (B,16,16,64)
    cols2 = [y1p[:, i::2, j::2, :][:, :7, :7, :] for i in range(4) for j in range(4)]
    patches2 = jnp.stack(cols2, axis=3).reshape(B, 49, 1024)
    patches2 = jnp.pad(patches2, ((0, 0), (0, S_PAD - 49), (0, 0)))
    patches2 = patches2.reshape(B * S_PAD, 1024)                           # bf16

    # --- fused conv2 + InstanceNorm + LeakyReLU + Conv2d(128, 1, 7, 1, 0) ---
    w2m = w2.transpose(2, 3, 1, 0).reshape(1024, 128).astype(jnp.bfloat16)  # (khkwic, oc)
    g = gamma.reshape(1, 128).astype(jnp.float32)
    b = beta.reshape(1, 128).astype(jnp.float32)
    w3m = w3.reshape(128, 49).T.astype(jnp.float32)            # (hw, c)
    w3m = jnp.pad(w3m, ((0, S_PAD - 49), (0, 0)))              # zero rows for padded S
    tb = 8 if B % 8 == 0 else B                                # batch tile per grid step
    partial = fused_tail(patches2, w2m, g, b, w3m, tb)         # (B, 128)
    return partial.sum(axis=1, keepdims=True)                  # (B, 1) == out.view(-1, 1)


# ---------------------------------------------------------------------------
# Deterministic parameter init (nn.Conv2d default scale, bias=False; IN affine=1/0)
# ---------------------------------------------------------------------------
def init_params(key):
    k1, k2, k3 = jax.random.split(key, 3)

    def conv_w(k, oc, ic, kh, kw):
        fan_in = ic * kh * kw
        bound = 1.0 / np.sqrt(fan_in)
        return jax.random.uniform(k, (oc, ic, kh, kw), jnp.float32, -bound, bound)

    w1 = conv_w(k1, 64, 1, 4, 4)
    w2 = conv_w(k2, 128, 64, 4, 4)
    w3 = conv_w(k3, 1, 128, 7, 7)
    gamma = jnp.ones((128,), jnp.float32)
    beta = jnp.zeros((128,), jnp.float32)
    return w1, w2, gamma, beta, w3


# ---------------------------------------------------------------------------
# Pure-JAX f32 reference for validation
# ---------------------------------------------------------------------------
def ref_forward(x, w1, w2, gamma, beta, w3):
    dn = ("NCHW", "OIHW", "NCHW")
    hp = lax.Precision.HIGHEST
    y = lax.conv_general_dilated(x, w1, (2, 2), ((1, 1), (1, 1)),
                                 dimension_numbers=dn, precision=hp)
    y = jnp.where(y > 0, y, LRELU_SLOPE * y)
    y = lax.conv_general_dilated(y, w2, (2, 2), ((1, 1), (1, 1)),
                                 dimension_numbers=dn, precision=hp)
    mean = y.mean(axis=(2, 3), keepdims=True)
    var = ((y - mean) ** 2).mean(axis=(2, 3), keepdims=True)
    y = (y - mean) / jnp.sqrt(var + EPS)
    y = y * gamma[None, :, None, None] + beta[None, :, None, None]
    y = jnp.where(y > 0, y, LRELU_SLOPE * y)
    y = lax.conv_general_dilated(y, w3, (1, 1), ((0, 0), (0, 0)),
                                 dimension_numbers=dn, precision=hp)
    return y.reshape(-1, 1)


if __name__ == "__main__":
    key = jax.random.PRNGKey(0)
    kx, kp = jax.random.split(key)
    # Input implied by the architecture: 28x28 single-channel images.
    x = jax.random.normal(kx, (2, 1, 28, 28), jnp.float32)
    params = init_params(kp)

    fwd = jax.jit(discriminator_forward)
    out = jax.block_until_ready(fwd(x, params))

    ref = ref_forward(x, *params)
    assert out.shape == (2, 1), out.shape
    np.testing.assert_allclose(np.asarray(out), np.asarray(ref), rtol=2e-2, atol=2e-2)
    print("KERNEL_OK")
</pallas_src>

<mosaic_0001>
module attributes {stable_mosaic.version = 11 : i64} {
  func.func @_conv1_kernel(%arg0: i32, %arg1: memref<392x16xbf16, #tpu.memory_space<vmem>>, %arg2: memref<16x64xbf16, #tpu.memory_space<vmem>>, %arg3: memref<392x64xbf16, #tpu.memory_space<vmem>>) attributes {dimension_semantics = [#tpu.dimension_semantics<parallel>], iteration_bounds = array<i64: 1>, scalar_prefetch = 0 : i64, scratch_operands = 0 : i64, tpu.core_type = #tpu.core_type<tc>, window_params = [{transform_indices = @transform_0, window_bounds = array<i64: 392, 16>}, {pipeline_mode = #tpu.pipeline_mode<synchronous>, transform_indices = @transform_1, window_bounds = array<i64: 16, 64>}, {transform_indices = @transform_2, window_bounds = array<i64: 392, 64>}]} {
    %c0 = arith.constant 0 : index
    %c0_0 = arith.constant 0 : index
    %0 = vector.load %arg1[%c0, %c0_0] : memref<392x16xbf16, #tpu.memory_space<vmem>>, vector<392x16xbf16>
    %c0_1 = arith.constant 0 : index
    %c0_2 = arith.constant 0 : index
    %1 = vector.load %arg2[%c0_1, %c0_2] : memref<16x64xbf16, #tpu.memory_space<vmem>>, vector<16x64xbf16>
    %cst = arith.constant dense<0.000000e+00> : vector<392x64xf32>
    %2 = tpu.matmul %0, %1, %cst {dimension_numbers = #tpu.dot_dimension_numbers<[1], [0], [0], [1], [0, 0, 1, 1], [], []>} : vector<392x16xbf16>, vector<16x64xbf16>, vector<392x64xf32> -> vector<392x64xf32>
    %cst_3 = arith.constant 0.000000e+00 : f32
    %3 = vector.broadcast %cst_3 : f32 to vector<392x64xf32>
    %4 = arith.cmpf ogt, %2, %3 : vector<392x64xf32>
    %cst_4 = arith.constant 2.000000e-01 : f32
    %5 = vector.broadcast %cst_4 : f32 to vector<392x64xf32>
    %6 = arith.mulf %5, %2 : vector<392x64xf32>
    %7 = arith.select %4, %2, %6 : vector<392x64xi1>, vector<392x64xf32>
    %8 = arith.truncf %7 : vector<392x64xf32> to vector<392x64xbf16>
    %c0_5 = arith.constant 0 : index
    %c0_6 = arith.constant 0 : index
    %9 = vector.load %arg3[%c0_5, %c0_6] : memref<392x64xbf16, #tpu.memory_space<vmem>>, vector<392x64xbf16>
    tpu.vector_store %arg3[%c0_5, %c0_6], %8 {strides = array<i32>} : memref<392x64xbf16, #tpu.memory_space<vmem>>, vector<392x64xbf16>,
    return
  }
  func.func @transform_0(%arg0: i32) -> (i32, i32) {
    %c0_i32 = arith.constant 0 : i32
    %c0_i32_0 = arith.constant 0 : i32
    return %arg0, %c0_i32 : i32, i32
  }
  func.func @transform_1(%arg0: i32) -> (i32, i32) {
    %c0_i32 = arith.constant 0 : i32
    %c0_i32_0 = arith.constant 0 : i32
    %c0_i32_1 = arith.constant 0 : i32
    return %c0_i32, %c0_i32_0 : i32, i32
  }
  func.func @transform_2(%arg0: i32) -> (i32, i32) {
    %c0_i32 = arith.constant 0 : i32
    %c0_i32_0 = arith.constant 0 : i32
    return %arg0, %c0_i32 : i32, i32
  }
}

module attributes {stable_mosaic.version = 11 : i64} {
  func.func @_tail_kernel(%arg0: i32, %arg1: memref<112x1024xbf16, #tpu.memory_space<vmem>>, %arg2: memref<1024x128xbf16, #tpu.memory_space<vmem>>, %arg3: memref<1x128xf32, #tpu.memory_space<vmem>>, %arg4: memref<1x128xf32, #tpu.memory_space<vmem>>, %arg5: memref<56x128xf32, #tpu.memory_space<vmem>>, %arg6: memref<2x128xf32, #tpu.memory_space<vmem>>) attributes {dimension_semantics = [#tpu.dimension_semantics<parallel>], iteration_bounds = array<i64: 1>, scalar_prefetch = 0 : i64, scratch_operands = 0 : i64, tpu.core_type = #tpu.core_type<tc>, window_params = [{transform_indices = @transform_0, window_bounds = array<i64: 112, 1024>}, {pipeline_mode = #tpu.pipeline_mode<synchronous>, transform_indices = @transform_1, window_bounds = array<i64: 1024, 128>}, {pipeline_mode = #tpu.pipeline_mode<synchronous>, transform_indices = @transform_2, window_bounds = array<i64: 1, 128>}, {pipeline_mode = #tpu.pipeline_mode<synchronous>, transform_indices = @transform_3, window_bounds = array<i64: 1, 128>}, {pipeline_mode = #tpu.pipeline_mode<synchronous>, transform_indices = @transform_4, window_bounds = array<i64: 56, 128>}, {transform_indices = @transform_5, window_bounds = array<i64: 2, 128>}]} {
    %c0 = arith.constant 0 : index
    %c0_0 = arith.constant 0 : index
    %0 = vector.load %arg1[%c0, %c0_0] : memref<112x1024xbf16, #tpu.memory_space<vmem>>, vector<112x1024xbf16>
    %c0_1 = arith.constant 0 : index
    %c0_2 = arith.constant 0 : index
    %1 = vector.load %arg2[%c0_1, %c0_2] : memref<1024x128xbf16, #tpu.memory_space<vmem>>, vector<1024x128xbf16>
    %cst = arith.constant dense<0.000000e+00> : vector<112x128xf32>
    %2 = tpu.matmul %0, %1, %cst {dimension_numbers = #tpu.dot_dimension_numbers<[1], [0], [0], [1], [0, 0, 1, 1], [], []>} : vector<112x1024xbf16>, vector<1024x128xbf16>, vector<112x128xf32> -> vector<112x128xf32>
    %3 = vector.shape_cast %2 : vector<112x128xf32> to vector<2x56x128xf32>
    %cst_3 = arith.constant dense<0.000000e+00> : vector<2x128xf32>
    %4 = vector.multi_reduction <add>, %3, %cst_3 [1] : vector<2x56x128xf32> to vector<2x128xf32>
    %5 = vector.shape_cast %4 : vector<2x128xf32> to vector<2x1x128xf32>
    %cst_4 = arith.constant 0.0204081628 : f32
    %6 = vector.broadcast %cst_4 : f32 to vector<2x1x128xf32>
    %7 = arith.mulf %5, %6 : vector<2x1x128xf32>
    %8 = arith.mulf %3, %3 : vector<2x56x128xf32>
    %cst_5 = arith.constant dense<0.000000e+00> : vector<2x128xf32>
    %9 = vector.multi_reduction <add>, %8, %cst_5 [1] : vector<2x56x128xf32> to vector<2x128xf32>
    %10 = vector.shape_cast %9 : vector<2x128xf32> to vector<2x1x128xf32>
    %cst_6 = arith.constant 0.0204081628 : f32
    %11 = vector.broadcast %cst_6 : f32 to vector<2x1x128xf32>
    %12 = arith.mulf %10, %11 : vector<2x1x128xf32>
    %13 = arith.mulf %7, %7 : vector<2x1x128xf32>
    %14 = arith.subf %12, %13 : vector<2x1x128xf32>
    %cst_7 = arith.constant 0.000000e+00 : f32
    %15 = vector.broadcast %cst_7 : f32 to vector<2x1x128xf32>
    %16 = arith.maximumf %14, %15 : vector<2x1x128xf32>
    %cst_8 = arith.constant 9.99999974E-6 : f32
    %17 = vector.broadcast %cst_8 : f32 to vector<2x1x128xf32>
    %18 = arith.addf %16, %17 : vector<2x1x128xf32>
    %19 = math.rsqrt %18 : vector<2x1x128xf32>
    %20 = vector.broadcast %7 : vector<2x1x128xf32> to vector<2x56x128xf32>
    %21 = arith.subf %3, %20 : vector<2x56x128xf32>
    %22 = vector.broadcast %19 : vector<2x1x128xf32> to vector<2x56x128xf32>
    %23 = arith.mulf %21, %22 : vector<2x56x128xf32>
    %c0_9 = arith.constant 0 : index
    %c0_10 = arith.constant 0 : index
    %24 = vector.load %arg3[%c0_9, %c0_10] : memref<1x128xf32, #tpu.memory_space<vmem>>, vector<1x128xf32>
    %25 = vector.shape_cast %24 : vector<1x128xf32> to vector<1x1x128xf32>
    %26 = vector.broadcast %25 : vector<1x1x128xf32> to vector<2x56x128xf32>
    %27 = arith.mulf %23, %26 : vector<2x56x128xf32>
    %c0_11 = arith.constant 0 : index
    %c0_12 = arith.constant 0 : index
    %28 = vector.load %arg4[%c0_11, %c0_12] : memref<1x128xf32, #tpu.memory_space<vmem>>, vector<1x128xf32>
    %29 = vector.shape_cast %28 : vector<1x128xf32> to vector<1x1x128xf32>
    %30 = vector.broadcast %29 : vector<1x1x128xf32> to vector<2x56x128xf32>
    %31 = arith.addf %27, %30 : vector<2x56x128xf32>
    %cst_13 = arith.constant 0.000000e+00 : f32
    %32 = vector.broadcast %cst_13 : f32 to vector<2x56x128xf32>
    %33 = arith.cmpf ogt, %31, %32 : vector<2x56x128xf32>
    %cst_14 = arith.constant 2.000000e-01 : f32
    %34 = vector.broadcast %cst_14 : f32 to vector<2x56x128xf32>
    %35 = arith.mulf %34, %31 : vector<2x56x128xf32>
    %36 = arith.select %33, %31, %35 : vector<2x56x128xi1>, vector<2x56x128xf32>
    %c0_15 = arith.constant 0 : index
    %c0_16 = arith.constant 0 : index
    %37 = vector.load %arg5[%c0_15, %c0_16] : memref<56x128xf32, #tpu.memory_space<vmem>>, vector<56x128xf32>
    %38 = vector.shape_cast %37 : vector<56x128xf32> to vector<1x56x128xf32>
    %39 = vector.broadcast %38 : vector<1x56x128xf32> to vector<2x56x128xf32>
    %40 = arith.mulf %36, %39 : vector<2x56x128xf32>
    %cst_17 = arith.constant dense<0.000000e+00> : vector<2x128xf32>
    %41 = vector.multi_reduction <add>, %40, %cst_17 [1] : vector<2x56x128xf32> to vector<2x128xf32>
    %c0_18 = arith.constant 0 : index
    %c0_19 = arith.constant 0 : index
    %42 = vector.load %arg6[%c0_18, %c0_19] : memref<2x128xf32, #tpu.memory_space<vmem>>, vector<2x128xf32>
    tpu.vector_store %arg6[%c0_18, %c0_19], %41 {strides = array<i32>} : memref<2x128xf32, #tpu.memory_space<vmem>>, vector<2x128xf32>,
    return
  }
  func.func @transform_0(%arg0: i32) -> (i32, i32) {
    %c0_i32 = arith.constant 0 : i32
    %c0_i32_0 = arith.constant 0 : i32
    return %arg0, %c0_i32 : i32, i32
  }
  func.func @transform_1(%arg0: i32) -> (i32, i32) {
    %c0_i32 = arith.constant 0 : i32
    %c0_i32_0 = arith.constant 0 : i32
    %c0_i32_1 = arith.constant 0 : i32
    return %c0_i32, %c0_i32_0 : i32, i32
  }
  func.func @transform_2(%arg0: i32) -> (i32, i32) {
    %c0_i32 = arith.constant 0 : i32
    %c0_i32_0 = arith.constant 0 : i32
    %c0_i32_1 = arith.constant 0 : i32
    return %c0_i32, %c0_i32_0 : i32, i32
  }
  func.func @transform_3(%arg0: i32) -> (i32, i32) {
    %c0_i32 = arith.constant 0 : i32
    %c0_i32_0 = arith.constant 0 : i32
    %c0_i32_1 = arith.constant 0 : i32
    return %c0_i32, %c0_i32_0 : i32, i32
  }
  func.func @transform_4(%arg0: i32) -> (i32, i32) {
    %c0_i32 = arith.constant 0 : i32
    %c0_i32_0 = arith.constant 0 : i32
    %c0_i32_1 = arith.constant 0 : i32
    return %c0_i32, %c0_i32_0 : i32, i32
  }
  func.func @transform_5(%arg0: i32) -> (i32, i32) {
    %c0_i32 = arith.constant 0 : i32
    %c0_i32_0 = arith.constant 0 : i32
    return %arg0, %c0_i32 : i32, i32
  }
}

</mosaic_0001>

<llo_original>
// kernel: discriminator_forward.2
$region0: #{discriminator_forward.2}
  #allocation0 [shape = 'u32[]', space=smem, size = 0x4, offset = 0x4, fixed_abs, tag = 'smem constant byte address 0x4 - core index']
  #allocation1 [shape = 'u32[72,128]{1,0:T(1,128)}', space=vmem, size = 0x9000, scoped, tag = 'internal scratch']
  %s0 = inlined_call_operand.vmem [shape: bf16[392,16], index: 0, kind: input, shape index: {}]
  %s1 = inlined_call_operand.vmem [shape: bf16[16,64], index: 1, kind: input, shape index: {}]
  %s2 = inlined_call_operand.vmem [shape: bf16[392,64], index: 2, kind: output, shape index: {}]
  %s3 = sld [smem:[#allocation0]]
  $region18: #{discriminator_forward.2} parent=0
    _
  %s5 = ssub.s32 1, %s3
  %s6 = scalar_select 0, %s5, %s3
  // Predicated region
  $region2: #{discriminator_forward.2} parent=0 // pred_check
    _
  $region3: #{discriminator_forward.2} parent=0 // pred_check_branch
    %8 = sbr.rel (0) target = $region5
  $region4: #{discriminator_forward.2} parent=0 // pred_region
    _
  $region5: #{discriminator_forward.2} parent=0 // pred_fallthru
    _
  // Predicated region
  $region6: #{discriminator_forward.2} parent=0 // pred_check
    _
  $region7: #{discriminator_forward.2} parent=0 // pred_check_branch
    %10 = sbr.rel (0) target = $region9
  $region8: #{discriminator_forward.2} parent=0 // pred_region
    _
  $region9: #{discriminator_forward.2} parent=0 // pred_fallthru
    _
  %v12 = vld [vmem:[%s0] sm:$0xf]
  %v13 = vld [vmem:[%s0 + $0x4] sm:$0xf]
  %v14 = vld [vmem:[%s0 + $0x8] sm:$0xf]
  %v15 = vld [vmem:[%s0 + $0xc] sm:$0xf]
  %v16 = vld [vmem:[%s0 + $0x10] sm:$0xf]
  %v17 = vld [vmem:[%s0 + $0x14] sm:$0xf]
  %v18 = vld [vmem:[%s0 + $0x18] sm:$0xf]
  %v19 = vld [vmem:[%s0 + $0x1c] sm:$0xf]
  %v20 = vld [vmem:[%s0 + $0x20] sm:$0xf]
  %v21 = vld [vmem:[%s0 + $0x24] sm:$0xf]
  %v22 = vld [vmem:[%s0 + $0x28] sm:$0xf]
  %v23 = vld [vmem:[%s0 + $0x2c] sm:$0xf]
  %v24 = vld [vmem:[%s0 + $0x30] sm:$0xf]
  %v25 = vld [vmem:[%s0 + $0x34] sm:$0xf]
  %v26 = vld [vmem:[%s0 + $0x38] sm:$0xf]
  %v27 = vld [vmem:[%s0 + $0x3c] sm:$0xf]
  %v28 = vld [vmem:[%s0 + $0x40] sm:$0xf]
  %v29 = vld [vmem:[%s0 + $0x44] sm:$0xf]
  %v30 = vld [vmem:[%s0 + $0x48] sm:$0xf]
  %v31 = vld [vmem:[%s0 + $0x4c] sm:$0xf]
  %v32 = vld [vmem:[%s0 + $0x50] sm:$0xf]
  %v33 = vld [vmem:[%s0 + $0x54] sm:$0xf]
  %v34 = vld [vmem:[%s0 + $0x58] sm:$0xf]
  %v35 = vld [vmem:[%s0 + $0x5c] sm:$0xf]
  %v36 = vld [vmem:[%s0 + $0x60] sm:$0xf]
  %v37 = vld [vmem:[%s0 + $0x64] sm:$0xf]
  %v38 = vld [vmem:[%s0 + $0x68] sm:$0xf]
  %v39 = vld [vmem:[%s0 + $0x6c] sm:$0xf]
  %v40 = vld [vmem:[%s0 + $0x70] sm:$0xf]
  %v41 = vld [vmem:[%s0 + $0x74] sm:$0xf]
  %v42 = vld [vmem:[%s0 + $0x78] sm:$0xf]
  %v43 = vld [vmem:[%s0 + $0x7c] sm:$0xf]
  %v44 = vld [vmem:[%s0 + $0x80] sm:$0xf]
  %v45 = vld [vmem:[%s0 + $0x84] sm:$0xf]
  %v46 = vld [vmem:[%s0 + $0x88] sm:$0xf]
  %v47 = vld [vmem:[%s0 + $0x8c] sm:$0xf]
  %v48 = vld [vmem:[%s0 + $0x90] sm:$0xf]
  %v49 = vld [vmem:[%s0 + $0x94] sm:$0xf]
  %v50 = vld [vmem:[%s0 + $0x98] sm:$0xf]
  %v51 = vld [vmem:[%s0 + $0x9c] sm:$0xf]
  %v52 = vld [vmem:[%s0 + $0xa0] sm:$0xf]
  %v53 = vld [vmem:[%s0 + $0xa4] sm:$0xf]
  %v54 = vld [vmem:[%s0 + $0xa8] sm:$0xf]
  %v55 = vld [vmem:[%s0 + $0xac] sm:$0xf]
  %v56 = vld [vmem:[%s0 + $0xb0] sm:$0xf]
  %v57 = vld [vmem:[%s0 + $0xb4] sm:$0xf]
  %v58 = vld [vmem:[%s0 + $0xb8] sm:$0xf]
  %v59 = vld [vmem:[%s0 + $0xbc] sm:$0xf]
  %v60 = vld [vmem:[%s0 + $0xc0] sm:$0xf]
  %v61 = vld [vmem:[%s1] sm:$0xf]
  %v62 = vld [vmem:[%s1 + $0x4] sm:$0xf]
  %v112 = vunpack.c.l.b16 %v12
  %v113 = vunpack.c.l.b16 %v13
  %v114 = vunpack.c.l.b16 %v14
  %v115 = vunpack.c.l.b16 %v15
  %v116 = vunpack.c.l.b16 %v16
  %v117 = vunpack.c.l.b16 %v17
  %v118 = vunpack.c.l.b16 %v18
  %v119 = vunpack.c.l.b16 %v19
  %v120 = vunpack.c.l.b16 %v20
  %v121 = vunpack.c.l.b16 %v21
  %v122 = vunpack.c.l.b16 %v22
  %v123 = vunpack.c.l.b16 %v23
  %v124 = vunpack.c.l.b16 %v24
  %v125 = vunpack.c.l.b16 %v25
  %v126 = vunpack.c.l.b16 %v26
  %v127 = vunpack.c.l.b16 %v27
  %v128 = vunpack.c.l.b16 %v28
  %v129 = vunpack.c.l.b16 %v29
  %v130 = vunpack.c.l.b16 %v30
  %v131 = vunpack.c.l.b16 %v31
  %v132 = vunpack.c.l.b16 %v32
  %v133 = vunpack.c.l.b16 %v33
  %v134 = vunpack.c.l.b16 %v34
  %v135 = vunpack.c.l.b16 %v35
  %v136 = vunpack.c.l.b16 %v36
  %v137 = vunpack.c.l.b16 %v37
  %v138 = vunpack.c.l.b16 %v38
  %v139 = vunpack.c.l.b16 %v39
  %v140 = vunpack.c.l.b16 %v40
  %v141 = vunpack.c.l.b16 %v41
  %v142 = vunpack.c.l.b16 %v42
  %v143 = vunpack.c.l.b16 %v43
  %v144 = vunpack.c.l.b16 %v44
  %v145 = vunpack.c.l.b16 %v45
  %v146 = vunpack.c.l.b16 %v46
  %v147 = vunpack.c.l.b16 %v47
  %v148 = vunpack.c.l.b16 %v48
  %v149 = vunpack.c.l.b16 %v49
  %v150 = vunpack.c.l.b16 %v50
  %v151 = vunpack.c.l.b16 %v51
  %v152 = vunpack.c.l.b16 %v52
  %v153 = vunpack.c.l.b16 %v53
  %v154 = vunpack.c.l.b16 %v54
  %v155 = vunpack.c.l.b16 %v55
  %v156 = vunpack.c.l.b16 %v56
  %v157 = vunpack.c.l.b16 %v57
  %v158 = vunpack.c.l.b16 %v58
  %v159 = vunpack.c.l.b16 %v59
  %v160 = vunpack.c.l.b16 %v60
  %v161 = vpack.c.b16 %v113, %v112
  %v162 = vpack.c.b16 %v115, %v114
  %v163 = vpack.c.b16 %v117, %v116
  %v164 = vpack.c.b16 %v119, %v118
  %v165 = vpack.c.b16 %v121, %v120
  %v166 = vpack.c.b16 %v123, %v122
  %v167 = vpack.c.b16 %v125, %v124
  %v168 = vpack.c.b16 %v127, %v126
  %v169 = vpack.c.b16 %v129, %v128
  %v170 = vpack.c.b16 %v131, %v130
  %v171 = vpack.c.b16 %v133, %v132
  %v172 = vpack.c.b16 %v135, %v134
  %v173 = vpack.c.b16 %v137, %v136
  %v174 = vpack.c.b16 %v139, %v138
  %v175 = vpack.c.b16 %v141, %v140
  %v176 = vpack.c.b16 %v143, %v142
  %v177 = vpack.c.b16 %v145, %v144
  %v178 = vpack.c.b16 %v147, %v146
  %v179 = vpack.c.b16 %v149, %v148
  %v180 = vpack.c.b16 %v151, %v150
  %v181 = vpack.c.b16 %v153, %v152
  %v182 = vpack.c.b16 %v155, %v154
  %v183 = vpack.c.b16 %v157, %v156
  %v184 = vpack.c.b16 %v159, %v158
  %v185 = vpack.c.b16 %v160, %v160
  %v188 = vunpack.c.l.b16 %v61
  %v189 = vunpack.c.l.b16 %v62
  %v190 = vpack.c.b16 %v189, %v188
  %vm192 = vcmask 130048
  %v194 = vsel %vm192, %v161, 0
  %v197 = vsel %vm192, %v162, 0
  %v200 = vsel %vm192, %v163, 0
  %v203 = vsel %vm192, %v164, 0
  %v206 = vsel %vm192, %v165, 0
  %v209 = vsel %vm192, %v166, 0
  %v212 = vsel %vm192, %v167, 0
  %v215 = vsel %vm192, %v168, 0
  %v218 = vsel %vm192, %v169, 0
  %v221 = vsel %vm192, %v170, 0
  %v224 = vsel %vm192, %v171, 0
  %v227 = vsel %vm192, %v172, 0
  %v230 = vsel %vm192, %v173, 0
  %v233 = vsel %vm192, %v174, 0
  %v236 = vsel %vm192, %v175, 0
  %v239 = vsel %vm192, %v176, 0
  %v242 = vsel %vm192, %v177, 0
  %v245 = vsel %vm192, %v178, 0
  %v248 = vsel %vm192, %v179, 0
  %v251 = vsel %vm192, %v180, 0
  %v254 = vsel %vm192, %v181, 0
  %v257 = vsel %vm192, %v182, 0
  %v260 = vsel %vm192, %v183, 0
  %v263 = vsel %vm192, %v184, 0
  %v266 = vsel %vm192, %v185, 0
  %268 = vmatpush.bf16.msra.mxu0 0
  %269 = vmatpush.bf16.msra.mxu0 0
  %270 = vmatpush.bf16.msra.mxu0 0
  %271 = vmatpush.bf16.msra.mxu0 0
  %272 = vmatpush.bf16.msra.mxu0 0
  %273 = vmatpush.bf16.msra.mxu0 0
  %274 = vmatpush.bf16.msra.mxu0 0
  %275 = vmatpush.bf16.msra.mxu0 %v190
  %276 = vmatmul.bf16.gmra.mxu0 %v194
  %v277 = vpop.f32.mrf.mxu0
  %v278 = vadd.f32 0.0, %v277
  %v279 = vpop.f32.mrf.mxu0
  %v280 = vadd.f32 0.0, %v279
  %281 = vmatmul.bf16.gmra.mxu0 %v197
  %v282 = vpop.f32.mrf.mxu0
  %v283 = vadd.f32 0.0, %v282
  %v284 = vpop.f32.mrf.mxu0
  %v285 = vadd.f32 0.0, %v284
  %286 = vmatmul.bf16.gmra.mxu0 %v200
  %v287 = vpop.f32.mrf.mxu0
  %v288 = vadd.f32 0.0, %v287
  %v289 = vpop.f32.mrf.mxu0
  %v290 = vadd.f32 0.0, %v289
  %291 = vmatmul.bf16.gmra.mxu0 %v203
  %v292 = vpop.f32.mrf.mxu0
  %v293 = vadd.f32 0.0, %v292
  %v294 = vpop.f32.mrf.mxu0
  %v295 = vadd.f32 0.0, %v294
  %296 = vmatmul.bf16.gmra.mxu0 %v206
  %v297 = vpop.f32.mrf.mxu0
  %v298 = vadd.f32 0.0, %v297
  %v299 = vpop.f32.mrf.mxu0
  %v300 = vadd.f32 0.0, %v299
  %301 = vmatmul.bf16.gmra.mxu0 %v209
  %v302 = vpop.f32.mrf.mxu0
  %v303 = vadd.f32 0.0, %v302
  %v304 = vpop.f32.mrf.mxu0
  %v305 = vadd.f32 0.0, %v304
  %306 = vmatmul.bf16.gmra.mxu0 %v212
  %v307 = vpop.f32.mrf.mxu0
  %v308 = vadd.f32 0.0, %v307
  %v309 = vpop.f32.mrf.mxu0
  %v310 = vadd.f32 0.0, %v309
  %311 = vmatmul.bf16.gmra.mxu0 %v215
  %v312 = vpop.f32.mrf.mxu0
  %v313 = vadd.f32 0.0, %v312
  %v314 = vpop.f32.mrf.mxu0
  %v315 = vadd.f32 0.0, %v314
  %316 = vmatmul.bf16.gmra.mxu0 %v218
  %v317 = vpop.f32.mrf.mxu0
  %v318 = vadd.f32 0.0, %v317
  %v319 = vpop.f32.mrf.mxu0
  %v320 = vadd.f32 0.0, %v319
  %321 = vmatmul.bf16.gmra.mxu0 %v221
  %v322 = vpop.f32.mrf.mxu0
  %v323 = vadd.f32 0.0, %v322
  %v324 = vpop.f32.mrf.mxu0
  %v325 = vadd.f32 0.0, %v324
  %326 = vmatmul.bf16.gmra.mxu0 %v224
  %v327 = vpop.f32.mrf.mxu0
  %v328 = vadd.f32 0.0, %v327
  %v329 = vpop.f32.mrf.mxu0
  %v330 = vadd.f32 0.0, %v329
  %331 = vmatmul.bf16.gmra.mxu0 %v227
  %v332 = vpop.f32.mrf.mxu0
  %v333 = vadd.f32 0.0, %v332
  %v334 = vpop.f32.mrf.mxu0
  %v335 = vadd.f32 0.0, %v334
  %336 = vmatmul.bf16.gmra.mxu0 %v230
  %v337 = vpop.f32.mrf.mxu0
  %v338 = vadd.f32 0.0, %v337
  %v339 = vpop.f32.mrf.mxu0
  %v340 = vadd.f32 0.0, %v339
  %341 = vmatmul.bf16.gmra.mxu0 %v233
  %v342 = vpop.f32.mrf.mxu0
  %v343 = vadd.f32 0.0, %v342
  %v344 = vpop.f32.mrf.mxu0
  %v345 = vadd.f32 0.0, %v344
  %346 = vmatmul.bf16.gmra.mxu0 %v236
  %v347 = vpop.f32.mrf.mxu0
  %v348 = vadd.f32 0.0, %v347
  %v349 = vpop.f32.mrf.mxu0
  %v350 = vadd.f32 0.0, %v349
  %351 = vmatmul.bf16.gmra.mxu0 %v239
  %v352 = vpop.f32.mrf.mxu0
  %v353 = vadd.f32 0.0, %v352
  %v354 = vpop.f32.mrf.mxu0
  %v355 = vadd.f32 0.0, %v354
  %356 = vmatmul.bf16.gmra.mxu0 %v242
  %v357 = vpop.f32.mrf.mxu0
  %v358 = vadd.f32 0.0, %v357
  %v359 = vpop.f32.mrf.mxu0
  %v360 = vadd.f32 0.0, %v359
  %361 = vmatmul.bf16.gmra.mxu0 %v245
  %v362 = vpop.f32.mrf.mxu0
  %v363 = vadd.f32 0.0, %v362
  %v364 = vpop.f32.mrf.mxu0
  %v365 = vadd.f32 0.0, %v364
  %366 = vmatmul.bf16.gmra.mxu0 %v248
  %v367 = vpop.f32.mrf.mxu0
  %v368 = vadd.f32 0.0, %v367
  %v369 = vpop.f32.mrf.mxu0
  %v370 = vadd.f32 0.0, %v369
  %371 = vmatmul.bf16.gmra.mxu0 %v251
  %v372 = vpop.f32.mrf.mxu0
  %v373 = vadd.f32 0.0, %v372
  %v374 = vpop.f32.mrf.mxu0
  %v375 = vadd.f32 0.0, %v374
  %376 = vmatmul.bf16.gmra.mxu0 %v254
  %v377 = vpop.f32.mrf.mxu0
  %v378 = vadd.f32 0.0, %v377
  %v379 = vpop.f32.mrf.mxu0
  %v380 = vadd.f32 0.0, %v379
  %381 = vmatmul.bf16.gmra.mxu0 %v257
  %v382 = vpop.f32.mrf.mxu0
  %v383 = vadd.f32 0.0, %v382
  %v384 = vpop.f32.mrf.mxu0
  %v385 = vadd.f32 0.0, %v384
  %386 = vmatmul.bf16.gmra.mxu0 %v260
  %v387 = vpop.f32.mrf.mxu0
  %v388 = vadd.f32 0.0, %v387
  %v389 = vpop.f32.mrf.mxu0
  %v390 = vadd.f32 0.0, %v389
  %391 = vmatmul.bf16.gmra.mxu0 %v263
  %v392 = vpop.f32.mrf.mxu0
  %v393 = vadd.f32 0.0, %v392
  %v394 = vpop.f32.mrf.mxu0
  %v395 = vadd.f32 0.0, %v394
  %396 = vmatmul.bf16.gmra.mxu0 %v266
  %v397 = vpop.f32.mrf.mxu0
  %v398 = vadd.f32 0.0, %v397
  %v399 = vpop.f32.mrf.mxu0
  %400 = vdwg.mxu0
  %vm401 = vcmp.gt.f32.partialorder %v278, 0.0
  %vm402 = vcmp.gt.f32.partialorder %v280, 0.0
  %vm403 = vcmp.gt.f32.partialorder %v283, 0.0
  %vm404 = vcmp.gt.f32.partialorder %v285, 0.0
  %vm405 = vcmp.gt.f32.partialorder %v288, 0.0
  %vm406 = vcmp.gt.f32.partialorder %v290, 0.0
  %vm407 = vcmp.gt.f32.partialorder %v293, 0.0
  %vm408 = vcmp.gt.f32.partialorder %v295, 0.0
  %vm409 = vcmp.gt.f32.partialorder %v298, 0.0
  %vm410 = vcmp.gt.f32.partialorder %v300, 0.0
  %vm411 = vcmp.gt.f32.partialorder %v303, 0.0
  %vm412 = vcmp.gt.f32.partialorder %v305, 0.0
  %vm413 = vcmp.gt.f32.partialorder %v308, 0.0
  %vm414 = vcmp.gt.f32.partialorder %v310, 0.0
  %vm415 = vcmp.gt.f32.partialorder %v313, 0.0
  %vm416 = vcmp.gt.f32.partialorder %v315, 0.0
  %vm417 = vcmp.gt.f32.partialorder %v318, 0.0
  %vm418 = vcmp.gt.f32.partialorder %v320, 0.0
  %vm419 = vcmp.gt.f32.partialorder %v323, 0.0
  %vm420 = vcmp.gt.f32.partialorder %v325, 0.0
  %vm421 = vcmp.gt.f32.partialorder %v328, 0.0
  %vm422 = vcmp.gt.f32.partialorder %v330, 0.0
  %vm423 = vcmp.gt.f32.partialorder %v333, 0.0
  %vm424 = vcmp.gt.f32.partialorder %v335, 0.0
  %vm425 = vcmp.gt.f32.partialorder %v338, 0.0
  %vm426 = vcmp.gt.f32.partialorder %v340, 0.0
  %vm427 = vcmp.gt.f32.partialorder %v343, 0.0
  %vm428 = vcmp.gt.f32.partialorder %v345, 0.0
  %vm429 = vcmp.gt.f32.partialorder %v348, 0.0
  %vm430 = vcmp.gt.f32.partialorder %v350, 0.0
  %vm431 = vcmp.gt.f32.partialorder %v353, 0.0
  %vm432 = vcmp.gt.f32.partialorder %v355, 0.0
  %vm433 = vcmp.gt.f32.partialorder %v358, 0.0
  %vm434 = vcmp.gt.f32.partialorder %v360, 0.0
  %vm435 = vcmp.gt.f32.partialorder %v363, 0.0
  %vm436 = vcmp.gt.f32.partialorder %v365, 0.0
  %vm437 = vcmp.gt.f32.partialorder %v368, 0.0
  %vm438 = vcmp.gt.f32.partialorder %v370, 0.0
  %vm439 = vcmp.gt.f32.partialorder %v373, 0.0
  %vm440 = vcmp.gt.f32.partialorder %v375, 0.0
  %vm441 = vcmp.gt.f32.partialorder %v378, 0.0
  %vm442 = vcmp.gt.f32.partialorder %v380, 0.0
  %vm443 = vcmp.gt.f32.partialorder %v383, 0.0
  %vm444 = vcmp.gt.f32.partialorder %v385, 0.0
  %vm445 = vcmp.gt.f32.partialorder %v388, 0.0
  %vm446 = vcmp.gt.f32.partialorder %v390, 0.0
  %vm447 = vcmp.gt.f32.partialorder %v393, 0.0
  %vm448 = vcmp.gt.f32.partialorder %v395, 0.0
  %vm449 = vcmp.gt.f32.partialorder %v398, 0.0
  %v450 = vmul.f32 %v278, 0.2
  %v451 = vmul.f32 %v280, 0.2
  %v452 = vmul.f32 %v283, 0.2
  %v453 = vmul.f32 %v285, 0.2
  %v454 = vmul.f32 %v288, 0.2
  %v455 = vmul.f32 %v290, 0.2
  %v456 = vmul.f32 %v293, 0.2
  %v457 = vmul.f32 %v295, 0.2
  %v458 = vmul.f32 %v298, 0.2
  %v459 = vmul.f32 %v300, 0.2
  %v460 = vmul.f32 %v303, 0.2
  %v461 = vmul.f32 %v305, 0.2
  %v462 = vmul.f32 %v308, 0.2
  %v463 = vmul.f32 %v310, 0.2
  %v464 = vmul.f32 %v313, 0.2
  %v465 = vmul.f32 %v315, 0.2
  %v466 = vmul.f32 %v318, 0.2
  %v467 = vmul.f32 %v320, 0.2
  %v468 = vmul.f32 %v323, 0.2
  %v469 = vmul.f32 %v325, 0.2
  %v470 = vmul.f32 %v328, 0.2
  %v471 = vmul.f32 %v330, 0.2
  %v472 = vmul.f32 %v333, 0.2
  %v473 = vmul.f32 %v335, 0.2
  %v474 = vmul.f32 %v338, 0.2
  %v475 = vmul.f32 %v340, 0.2
  %v476 = vmul.f32 %v343, 0.2
  %v477 = vmul.f32 %v345, 0.2
  %v478 = vmul.f32 %v348, 0.2
  %v479 = vmul.f32 %v350, 0.2
  %v480 = vmul.f32 %v353, 0.2
  %v481 = vmul.f32 %v355, 0.2
  %v482 = vmul.f32 %v358, 0.2
  %v483 = vmul.f32 %v360, 0.2
  %v484 = vmul.f32 %v363, 0.2
  %v485 = vmul.f32 %v365, 0.2
  %v486 = vmul.f32 %v368, 0.2
  %v487 = vmul.f32 %v370, 0.2
  %v488 = vmul.f32 %v373, 0.2
  %v489 = vmul.f32 %v375, 0.2
  %v490 = vmul.f32 %v378, 0.2
  %v491 = vmul.f32 %v380, 0.2
  %v492 = vmul.f32 %v383, 0.2
  %v493 = vmul.f32 %v385, 0.2
  %v494 = vmul.f32 %v388, 0.2
  %v495 = vmul.f32 %v390, 0.2
  %v496 = vmul.f32 %v393, 0.2
  %v497 = vmul.f32 %v395, 0.2
  %v498 = vmul.f32 %v398, 0.2
  %v499 = vsel %vm401, %v278, %v450
  %v500 = vsel %vm402, %v280, %v451
  %v501 = vsel %vm403, %v283, %v452
  %v502 = vsel %vm404, %v285, %v453
  %v503 = vsel %vm405, %v288, %v454
  %v504 = vsel %vm406, %v290, %v455
  %v505 = vsel %vm407, %v293, %v456
  %v506 = vsel %vm408, %v295, %v457
  %v507 = vsel %vm409, %v298, %v458
  %v508 = vsel %vm410, %v300, %v459
  %v509 = vsel %vm411, %v303, %v460
  %v510 = vsel %vm412, %v305, %v461
  %v511 = vsel %vm413, %v308, %v462
  %v512 = vsel %vm414, %v310, %v463
  %v513 = vsel %vm415, %v313, %v464
  %v514 = vsel %vm416, %v315, %v465
  %v515 = vsel %vm417, %v318, %v466
  %v516 = vsel %vm418, %v320, %v467
  %v517 = vsel %vm419, %v323, %v468
  %v518 = vsel %vm420, %v325, %v469
  %v519 = vsel %vm421, %v328, %v470
  %v520 = vsel %vm422, %v330, %v471
  %v521 = vsel %vm423, %v333, %v472
  %v522 = vsel %vm424, %v335, %v473
  %v523 = vsel %vm425, %v338, %v474
  %v524 = vsel %vm426, %v340, %v475
  %v525 = vsel %vm427, %v343, %v476
  %v526 = vsel %vm428, %v345, %v477
  %v527 = vsel %vm429, %v348, %v478
  %v528 = vsel %vm430, %v350, %v479
  %v529 = vsel %vm431, %v353, %v480
  %v530 = vsel %vm432, %v355, %v481
  %v531 = vsel %vm433, %v358, %v482
  %v532 = vsel %vm434, %v360, %v483
  %v533 = vsel %vm435, %v363, %v484
  %v534 = vsel %vm436, %v365, %v485
  %v535 = vsel %vm437, %v368, %v486
  %v536 = vsel %vm438, %v370, %v487
  %v537 = vsel %vm439, %v373, %v488
  %v538 = vsel %vm440, %v375, %v489
  %v539 = vsel %vm441, %v378, %v490
  %v540 = vsel %vm442, %v380, %v491
  %v541 = vsel %vm443, %v383, %v492
  %v542 = vsel %vm444, %v385, %v493
  %v543 = vsel %vm445, %v388, %v494
  %v544 = vsel %vm446, %v390, %v495
  %v545 = vsel %vm447, %v393, %v496
  %v546 = vsel %vm448, %v395, %v497
  %v547 = vsel %vm449, %v398, %v498
  %v548 = vpack.c.bf16 %v499, %v499
  %v549 = vpack.c.bf16 %v500, %v500
  %v550 = vpack.c.bf16 %v501, %v501
  %v551 = vpack.c.bf16 %v502, %v502
  %v552 = vpack.c.bf16 %v503, %v503
  %v553 = vpack.c.bf16 %v504, %v504
  %v554 = vpack.c.bf16 %v505, %v505
  %v555 = vpack.c.bf16 %v506, %v506
  %v556 = vpack.c.bf16 %v507, %v507
  %v557 = vpack.c.bf16 %v508, %v508
  %v558 = vpack.c.bf16 %v509, %v509
  %v559 = vpack.c.bf16 %v510, %v510
  %v560 = vpack.c.bf16 %v511, %v511
  %v561 = vpack.c.bf16 %v512, %v512
  %v562 = vpack.c.bf16 %v513, %v513
  %v563 = vpack.c.bf16 %v514, %v514
  %v564 = vpack.c.bf16 %v515, %v515
  %v565 = vpack.c.bf16 %v516, %v516
  %v566 = vpack.c.bf16 %v517, %v517
  %v567 = vpack.c.bf16 %v518, %v518
  %v568 = vpack.c.bf16 %v519, %v519
  %v569 = vpack.c.bf16 %v520, %v520
  %v570 = vpack.c.bf16 %v521, %v521
  %v571 = vpack.c.bf16 %v522, %v522
  %v572 = vpack.c.bf16 %v523, %v523
  %v573 = vpack.c.bf16 %v524, %v524
  %v574 = vpack.c.bf16 %v525, %v525
  %v575 = vpack.c.bf16 %v526, %v526
  %v576 = vpack.c.bf16 %v527, %v527
  %v577 = vpack.c.bf16 %v528, %v528
  %v578 = vpack.c.bf16 %v529, %v529
  %v579 = vpack.c.bf16 %v530, %v530
  %v580 = vpack.c.bf16 %v531, %v531
  %v581 = vpack.c.bf16 %v532, %v532
  %v582 = vpack.c.bf16 %v533, %v533
  %v583 = vpack.c.bf16 %v534, %v534
  %v584 = vpack.c.bf16 %v535, %v535
  %v585 = vpack.c.bf16 %v536, %v536
  %v586 = vpack.c.bf16 %v537, %v537
  %v587 = vpack.c.bf16 %v538, %v538
  %v588 = vpack.c.bf16 %v539, %v539
  %v589 = vpack.c.bf16 %v540, %v540
  %v590 = vpack.c.bf16 %v541, %v541
  %v591 = vpack.c.bf16 %v542, %v542
  %v592 = vpack.c.bf16 %v543, %v543
  %v593 = vpack.c.bf16 %v544, %v544
  %v594 = vpack.c.bf16 %v545, %v545
  %v595 = vpack.c.bf16 %v546, %v546
  %v596 = vpack.c.bf16 %v547, %v547
  %vm597 = vcmask 519168
  %598 = vst.msk [vmem:[%s2] sm:$0xf] %vm597, %v548
  %599 = vst.msk [vmem:[%s2 + $0x4] sm:$0xf] %vm597, %v549
  %600 = vst.msk [vmem:[%s2 + $0x8] sm:$0xf] %vm597, %v550
  %601 = vst.msk [vmem:[%s2 + $0xc] sm:$0xf] %vm597, %v551
  %602 = vst.msk [vmem:[%s2 + $0x10] sm:$0xf] %vm597, %v552
  %603 = vst.msk [vmem:[%s2 + $0x14] sm:$0xf] %vm597, %v553
  %604 = vst.msk [vmem:[%s2 + $0x18] sm:$0xf] %vm597, %v554
  %605 = vst.msk [vmem:[%s2 + $0x1c] sm:$0xf] %vm597, %v555
  %606 = vst.msk [vmem:[%s2 + $0x20] sm:$0xf] %vm597, %v556
  %607 = vst.msk [vmem:[%s2 + $0x24] sm:$0xf] %vm597, %v557
  %608 = vst.msk [vmem:[%s2 + $0x28] sm:$0xf] %vm597, %v558
  %609 = vst.msk [vmem:[%s2 + $0x2c] sm:$0xf] %vm597, %v559
  %610 = vst.msk [vmem:[%s2 + $0x30] sm:$0xf] %vm597, %v560
  %611 = vst.msk [vmem:[%s2 + $0x34] sm:$0xf] %vm597, %v561
  %612 = vst.msk [vmem:[%s2 + $0x38] sm:$0xf] %vm597, %v562
  %613 = vst.msk [vmem:[%s2 + $0x3c] sm:$0xf] %vm597, %v563
  %614 = vst.msk [vmem:[%s2 + $0x40] sm:$0xf] %vm597, %v564
  %615 = vst.msk [vmem:[%s2 + $0x44] sm:$0xf] %vm597, %v565
  %616 = vst.msk [vmem:[%s2 + $0x48] sm:$0xf] %vm597, %v566
  %617 = vst.msk [vmem:[%s2 + $0x4c] sm:$0xf] %vm597, %v567
  %618 = vst.msk [vmem:[%s2 + $0x50] sm:$0xf] %vm597, %v568
  %619 = vst.msk [vmem:[%s2 + $0x54] sm:$0xf] %vm597, %v569
  %620 = vst.msk [vmem:[%s2 + $0x58] sm:$0xf] %vm597, %v570
  %621 = vst.msk [vmem:[%s2 + $0x5c] sm:$0xf] %vm597, %v571
  %622 = vst.msk [vmem:[%s2 + $0x60] sm:$0xf] %vm597, %v572
  %623 = vst.msk [vmem:[%s2 + $0x64] sm:$0xf] %vm597, %v573
  %624 = vst.msk [vmem:[%s2 + $0x68] sm:$0xf] %vm597, %v574
  %625 = vst.msk [vmem:[%s2 + $0x6c] sm:$0xf] %vm597, %v575
  %626 = vst.msk [vmem:[%s2 + $0x70] sm:$0xf] %vm597, %v576
  %627 = vst.msk [vmem:[%s2 + $0x74] sm:$0xf] %vm597, %v577
  %628 = vst.msk [vmem:[%s2 + $0x78] sm:$0xf] %vm597, %v578
  %629 = vst.msk [vmem:[%s2 + $0x7c] sm:$0xf] %vm597, %v579
  %630 = vst.msk [vmem:[%s2 + $0x80] sm:$0xf] %vm597, %v580
  %631 = vst.msk [vmem:[%s2 + $0x84] sm:$0xf] %vm597, %v581
  %632 = vst.msk [vmem:[%s2 + $0x88] sm:$0xf] %vm597, %v582
  %633 = vst.msk [vmem:[%s2 + $0x8c] sm:$0xf] %vm597, %v583
  %634 = vst.msk [vmem:[%s2 + $0x90] sm:$0xf] %vm597, %v584
  %635 = vst.msk [vmem:[%s2 + $0x94] sm:$0xf] %vm597, %v585
  %636 = vst.msk [vmem:[%s2 + $0x98] sm:$0xf] %vm597, %v586
  %637 = vst.msk [vmem:[%s2 + $0x9c] sm:$0xf] %vm597, %v587
  %638 = vst.msk [vmem:[%s2 + $0xa0] sm:$0xf] %vm597, %v588
  %639 = vst.msk [vmem:[%s2 + $0xa4] sm:$0xf] %vm597, %v589
  %640 = vst.msk [vmem:[%s2 + $0xa8] sm:$0xf] %vm597, %v590
  %641 = vst.msk [vmem:[%s2 + $0xac] sm:$0xf] %vm597, %v591
  %642 = vst.msk [vmem:[%s2 + $0xb0] sm:$0xf] %vm597, %v592
  %643 = vst.msk [vmem:[%s2 + $0xb4] sm:$0xf] %vm597, %v593
  %644 = vst.msk [vmem:[%s2 + $0xb8] sm:$0xf] %vm597, %v594
  %645 = vst.msk [vmem:[%s2 + $0xbc] sm:$0xf] %vm597, %v595
  %646 = vst.msk [vmem:[%s2 + $0xc0] sm:$0xf] %vm597, %v596
  // Predicated region
  $region10: #{discriminator_forward.2} parent=0 // pred_check
    _
  $region11: #{discriminator_forward.2} parent=0 // pred_check_branch
    %648 = sbr.rel (0) target = $region13
  $region12: #{discriminator_forward.2} parent=0 // pred_region
    _
  $region13: #{discriminator_forward.2} parent=0 // pred_fallthru
    _
  // Predicated region
  $region14: #{discriminator_forward.2} parent=0 // pred_check
    _
  $region15: #{discriminator_forward.2} parent=0 // pred_check_branch
    %650 = sbr.rel (0) target = $region17
  $region16: #{discriminator_forward.2} parent=0 // pred_region
    _
  $region17: #{discriminator_forward.2} parent=0 // pred_fallthru
    _

// kernel: discriminator_forward.3
$region0: #{discriminator_forward.3}
  #allocation0 [shape = 'u32[]', space=smem, size = 0x4, offset = 0x4, fixed_abs, tag = 'smem constant byte address 0x4 - core index']
  #allocation1 [shape = 'u32[72,128]{1,0:T(1,128)}', space=vmem, size = 0x9000, scoped, tag = 'internal scratch']
  %s0 = inlined_call_operand.vmem [shape: bf16[112,1024], index: 0, kind: input, shape index: {}]
  %s1 = inlined_call_operand.vmem [shape: bf16[1024,128], index: 1, kind: input, shape index: {}]
  %s2 = inlined_call_operand.vmem [shape: f32[1,128], index: 2, kind: input, shape index: {}]
  %s3 = inlined_call_operand.vmem [shape: f32[1,128], index: 3, kind: input, shape index: {}]
  %s4 = inlined_call_operand.vmem [shape: f32[56,128], index: 4, kind: input, shape index: {}]
  %s5 = inlined_call_operand.vmem [shape: f32[2,128], index: 5, kind: output, shape index: {}]
  %s6 = sld [smem:[#allocation0]]
  $region30: #{discriminator_forward.3} parent=0
    _
  %s8 = ssub.s32 1, %s6
  %s9 = scalar_select 0, %s8, %s6
  // Predicated region
  $region2: #{discriminator_forward.3} parent=0 // pred_check
    _
  $region3: #{discriminator_forward.3} parent=0 // pred_check_branch
    %11 = sbr.rel (0) target = $region5
  $region4: #{discriminator_forward.3} parent=0 // pred_region
    _
  $region5: #{discriminator_forward.3} parent=0 // pred_fallthru
    _
  // Predicated region
  $region6: #{discriminator_forward.3} parent=0 // pred_check
    _
  $region7: #{discriminator_forward.3} parent=0 // pred_check_branch
    %13 = sbr.rel (0) target = $region9
  $region8: #{discriminator_forward.3} parent=0 // pred_region
    _
  $region9: #{discriminator_forward.3} parent=0 // pred_fallthru
    _
  // Predicated region
  $region10: #{discriminator_forward.3} parent=0 // pred_check
    _
  $region11: #{discriminator_forward.3} parent=0 // pred_check_branch
    %15 = sbr.rel (0) target = $region13
  $region12: #{discriminator_forward.3} parent=0 // pred_region
    _
  $region13: #{discriminator_forward.3} parent=0 // pred_fallthru
    _
  // Predicated region
  $region14: #{discriminator_forward.3} parent=0 // pred_check
    _
  $region15: #{discriminator_forward.3} parent=0 // pred_check_branch
    %17 = sbr.rel (0) target = $region17
  $region16: #{discriminator_forward.3} parent=0 // pred_region
    _
  $region17: #{discriminator_forward.3} parent=0 // pred_fallthru
    _
  // Predicated region
  $region18: #{discriminator_forward.3} parent=0 // pred_check
    _
  $region19: #{discriminator_forward.3} parent=0 // pred_check_branch
    %19 = sbr.rel (0) target = $region21
  $region20: #{discriminator_forward.3} parent=0 // pred_region
    _
  $region21: #{discriminator_forward.3} parent=0 // pred_fallthru
    _
  %v20 = vld [vmem:[%s0] sm:$0xff]
  %v21 = vld [vmem:[%s0 + $0x8] sm:$0xff]
  %v22 = vld [vmem:[%s0 + $0x10] sm:$0xff]
  %v23 = vld [vmem:[%s0 + $0x18] sm:$0xff]
  %v24 = vld [vmem:[%s0 + $0x20] sm:$0xff]
  %v25 = vld [vmem:[%s0 + $0x28] sm:$0xff]
  %v26 = vld [vmem:[%s0 + $0x30] sm:$0xff]
  %v27 = vld [vmem:[%s0 + $0x38] sm:$0xff]
  %v28 = vld [vmem:[%s0 + $0x40] sm:$0xff]
  %v29 = vld [vmem:[%s0 + $0x48] sm:$0xff]
  %v30 = vld [vmem:[%s0 + $0x50] sm:$0xff]
  %v31 = vld [vmem:[%s0 + $0x58] sm:$0xff]
  %v32 = vld [vmem:[%s0 + $0x60] sm:$0xff]
  %v33 = vld [vmem:[%s0 + $0x68] sm:$0xff]
  %v34 = vld [vmem:[%s0 + $0x70] sm:$0xff]
  %v35 = vld [vmem:[%s0 + $0x78] sm:$0xff]
  %v36 = vld [vmem:[%s0 + $0x80] sm:$0xff]
  %v37 = vld [vmem:[%s0 + $0x88] sm:$0xff]
  %v38 = vld [vmem:[%s0 + $0x90] sm:$0xff]
  %v39 = vld [vmem:[%s0 + $0x98] sm:$0xff]
  %v40 = vld [vmem:[%s0 + $0xa0] sm:$0xff]
  %v41 = vld [vmem:[%s0 + $0xa8] sm:$0xff]
  %v42 = vld [vmem:[%s0 + $0xb0] sm:$0xff]
  %v43 = vld [vmem:[%s0 + $0xb8] sm:$0xff]
  %v44 = vld [vmem:[%s0 + $0xc0] sm:$0xff]
  %v45 = vld [vmem:[%s0 + $0xc8] sm:$0xff]
  %v46 = vld [vmem:[%s0 + $0xd0] sm:$0xff]
  %v47 = vld [vmem:[%s0 + $0xd8] sm:$0xff]
  %v48 = vld [vmem:[%s0 + $0xe0] sm:$0xff]
  %v49 = vld [vmem:[%s0 + $0xe8] sm:$0xff]
  %v50 = vld [vmem:[%s0 + $0xf0] sm:$0xff]
  %v51 = vld [vmem:[%s0 + $0xf8] sm:$0xff]
  %v52 = vld [vmem:[%s0 + $0x100] sm:$0xff]
  %v53 = vld [vmem:[%s0 + $0x108] sm:$0xff]
  %v54 = vld [vmem:[%s0 + $0x110] sm:$0xff]
  %v55 = vld [vmem:[%s0 + $0x118] sm:$0xff]
  %v56 = vld [vmem:[%s0 + $0x120] sm:$0xff]
  %v57 = vld [vmem:[%s0 + $0x128] sm:$0xff]
  %v58 = vld [vmem:[%s0 + $0x130] sm:$0xff]
  %v59 = vld [vmem:[%s0 + $0x138] sm:$0xff]
  %v60 = vld [vmem:[%s0 + $0x140] sm:$0xff]
  %v61 = vld [vmem:[%s0 + $0x148] sm:$0xff]
  %v62 = vld [vmem:[%s0 + $0x150] sm:$0xff]
  %v63 = vld [vmem:[%s0 + $0x158] sm:$0xff]
  %v64 = vld [vmem:[%s0 + $0x160] sm:$0xff]
  %v65 = vld [vmem:[%s0 + $0x168] sm:$0xff]
  %v66 = vld [vmem:[%s0 + $0x170] sm:$0xff]
  %v67 = vld [vmem:[%s0 + $0x178] sm:$0xff]
  %v68 = vld [vmem:[%s0 + $0x180] sm:$0xff]
  %v69 = vld [vmem:[%s0 + $0x188] sm:$0xff]
  %v70 = vld [vmem:[%s0 + $0x190] sm:$0xff]
  %v71 = vld [vmem:[%s0 + $0x198] sm:$0xff]
  %v72 = vld [vmem:[%s0 + $0x1a0] sm:$0xff]
  %v73 = vld [vmem:[%s0 + $0x1a8] sm:$0xff]
  %v74 = vld [vmem:[%s0 + $0x1b0] sm:$0xff]
  %v75 = vld [vmem:[%s0 + $0x1b8] sm:$0xff]
  %v76 = vld [vmem:[%s1] sm:$0xf]
  %v77 = vld [vmem:[%s1 + $0x4] sm:$0xf]
  %v78 = vld [vmem:[%s1 + $0x8] sm:$0xf]
  %v79 = vld [vmem:[%s1 + $0xc] sm:$0xf]
  %v80 = vld [vmem:[%s1 + $0x10] sm:$0xf]
  %v81 = vld [vmem:[%s1 + $0x14] sm:$0xf]
  %v82 = vld [vmem:[%s1 + $0x18] sm:$0xf]
  %v83 = vld [vmem:[%s1 + $0x1c] sm:$0xf]
  %v84 = vld [vmem:[%s1 + $0x20] sm:$0xf]
  %v85 = vld [vmem:[%s1 + $0x24] sm:$0xf]
  %v86 = vld [vmem:[%s1 + $0x28] sm:$0xf]
  %v87 = vld [vmem:[%s1 + $0x2c] sm:$0xf]
  %v88 = vld [vmem:[%s1 + $0x30] sm:$0xf]
  %v89 = vld [vmem:[%s1 + $0x34] sm:$0xf]
  %v90 = vld [vmem:[%s1 + $0x38] sm:$0xf]
  %v91 = vld [vmem:[%s1 + $0x3c] sm:$0xf]
  %v92 = vld [vmem:[%s1 + $0x40] sm:$0xf]
  %v93 = vld [vmem:[%s1 + $0x44] sm:$0xf]
  %v94 = vld [vmem:[%s1 + $0x48] sm:$0xf]
  %v95 = vld [vmem:[%s1 + $0x4c] sm:$0xf]
  %v96 = vld [vmem:[%s1 + $0x50] sm:$0xf]
  %v97 = vld [vmem:[%s1 + $0x54] sm:$0xf]
  %v98 = vld [vmem:[%s1 + $0x58] sm:$0xf]
  %v99 = vld [vmem:[%s1 + $0x5c] sm:$0xf]
  %v100 = vld [vmem:[%s1 + $0x60] sm:$0xf]
  %v101 = vld [vmem:[%s1 + $0x64] sm:$0xf]
  %v102 = vld [vmem:[%s1 + $0x68] sm:$0xf]
  %v103 = vld [vmem:[%s1 + $0x6c] sm:$0xf]
  %v104 = vld [vmem:[%s1 + $0x70] sm:$0xf]
  %v105 = vld [vmem:[%s1 + $0x74] sm:$0xf]
  %v106 = vld [vmem:[%s1 + $0x78] sm:$0xf]
  %v107 = vld [vmem:[%s1 + $0x7c] sm:$0xf]
  %v108 = vld [vmem:[%s1 + $0x80] sm:$0xf]
  %v109 = vld [vmem:[%s1 + $0x84] sm:$0xf]
  %v110 = vld [vmem:[%s1 + $0x88] sm:$0xf]
  %v111 = vld [vmem:[%s1 + $0x8c] sm:$0xf]
  %v112 = vld [vmem:[%s1 + $0x90] sm:$0xf]
  %v113 = vld [vmem:[%s1 + $0x94] sm:$0xf]
  %v114 = vld [vmem:[%s1 + $0x98] sm:$0xf]
  %v115 = vld [vmem:[%s1 + $0x9c] sm:$0xf]
  %v116 = vld [vmem:[%s1 + $0xa0] sm:$0xf]
  %v117 = vld [vmem:[%s1 + $0xa4] sm:$0xf]
  %v118 = vld [vmem:[%s1 + $0xa8] sm:$0xf]
  %v119 = vld [vmem:[%s1 + $0xac] sm:$0xf]
  %v120 = vld [vmem:[%s1 + $0xb0] sm:$0xf]
  %v121 = vld [vmem:[%s1 + $0xb4] sm:$0xf]
  %v122 = vld [vmem:[%s1 + $0xb8] sm:$0xf]
  %v123 = vld [vmem:[%s1 + $0xbc] sm:$0xf]
  %v124 = vld [vmem:[%s1 + $0xc0] sm:$0xf]
  %v125 = vld [vmem:[%s1 + $0xc4] sm:$0xf]
  %v126 = vld [vmem:[%s1 + $0xc8] sm:$0xf]
  %v127 = vld [vmem:[%s1 + $0xcc] sm:$0xf]
  %v128 = vld [vmem:[%s1 + $0xd0] sm:$0xf]
  %v129 = vld [vmem:[%s1 + $0xd4] sm:$0xf]
  %v130 = vld [vmem:[%s1 + $0xd8] sm:$0xf]
  %v131 = vld [vmem:[%s1 + $0xdc] sm:$0xf]
  %v132 = vld [vmem:[%s1 + $0xe0] sm:$0xf]
  %v133 = vld [vmem:[%s1 + $0xe4] sm:$0xf]
  %v134 = vld [vmem:[%s1 + $0xe8] sm:$0xf]
  %v135 = vld [vmem:[%s1 + $0xec] sm:$0xf]
  %v136 = vld [vmem:[%s1 + $0xf0] sm:$0xf]
  %v137 = vld [vmem:[%s1 + $0xf4] sm:$0xf]
  %v138 = vld [vmem:[%s1 + $0xf8] sm:$0xf]
  %v139 = vld [vmem:[%s1 + $0xfc] sm:$0xf]
  %v140 = vld [vmem:[%s1 + $0x100] sm:$0xf]
  %v141 = vld [vmem:[%s1 + $0x104] sm:$0xf]
  %v142 = vld [vmem:[%s1 + $0x108] sm:$0xf]
  %v143 = vld [vmem:[%s1 + $0x10c] sm:$0xf]
  %v144 = vld [vmem:[%s1 + $0x110] sm:$0xf]
  %v145 = vld [vmem:[%s1 + $0x114] sm:$0xf]
  %v146 = vld [vmem:[%s1 + $0x118] sm:$0xf]
  %v147 = vld [vmem:[%s1 + $0x11c] sm:$0xf]
  %v148 = vld [vmem:[%s1 + $0x120] sm:$0xf]
  %v149 = vld [vmem:[%s1 + $0x124] sm:$0xf]
  %v150 = vld [vmem:[%s1 + $0x128] sm:$0xf]
  %v151 = vld [vmem:[%s1 + $0x12c] sm:$0xf]
  %v152 = vld [vmem:[%s1 + $0x130] sm:$0xf]
  %v153 = vld [vmem:[%s1 + $0x134] sm:$0xf]
  %v154 = vld [vmem:[%s1 + $0x138] sm:$0xf]
  %v155 = vld [vmem:[%s1 + $0x13c] sm:$0xf]
  %v156 = vld [vmem:[%s1 + $0x140] sm:$0xf]
  %v157 = vld [vmem:[%s1 + $0x144] sm:$0xf]
  %v158 = vld [vmem:[%s1 + $0x148] sm:$0xf]
  %v159 = vld [vmem:[%s1 + $0x14c] sm:$0xf]
  %v160 = vld [vmem:[%s1 + $0x150] sm:$0xf]
  %v161 = vld [vmem:[%s1 + $0x154] sm:$0xf]
  %v162 = vld [vmem:[%s1 + $0x158] sm:$0xf]
  %v163 = vld [vmem:[%s1 + $0x15c] sm:$0xf]
  %v164 = vld [vmem:[%s1 + $0x160] sm:$0xf]
  %v165 = vld [vmem:[%s1 + $0x164] sm:$0xf]
  %v166 = vld [vmem:[%s1 + $0x168] sm:$0xf]
  %v167 = vld [vmem:[%s1 + $0x16c] sm:$0xf]
  %v168 = vld [vmem:[%s1 + $0x170] sm:$0xf]
  %v169 = vld [vmem:[%s1 + $0x174] sm:$0xf]
  %v170 = vld [vmem:[%s1 + $0x178] sm:$0xf]
  %v171 = vld [vmem:[%s1 + $0x17c] sm:$0xf]
  %v172 = vld [vmem:[%s1 + $0x180] sm:$0xf]
  %v173 = vld [vmem:[%s1 + $0x184] sm:$0xf]
  %v174 = vld [vmem:[%s1 + $0x188] sm:$0xf]
  %v175 = vld [vmem:[%s1 + $0x18c] sm:$0xf]
  %v176 = vld [vmem:[%s1 + $0x190] sm:$0xf]
  %v177 = vld [vmem:[%s1 + $0x194] sm:$0xf]
  %v178 = vld [vmem:[%s1 + $0x198] sm:$0xf]
  %v179 = vld [vmem:[%s1 + $0x19c] sm:$0xf]
  %v180 = vld [vmem:[%s1 + $0x1a0] sm:$0xf]
  %v181 = vld [vmem:[%s1 + $0x1a4] sm:$0xf]
  %v182 = vld [vmem:[%s1 + $0x1a8] sm:$0xf]
  %v183 = vld [vmem:[%s1 + $0x1ac] sm:$0xf]
  %v184 = vld [vmem:[%s1 + $0x1b0] sm:$0xf]
  %v185 = vld [vmem:[%s1 + $0x1b4] sm:$0xf]
  %v186 = vld [vmem:[%s1 + $0x1b8] sm:$0xf]
  %v187 = vld [vmem:[%s1 + $0x1bc] sm:$0xf]
  %v188 = vld [vmem:[%s1 + $0x1c0] sm:$0xf]
  %v189 = vld [vmem:[%s1 + $0x1c4] sm:$0xf]
  %v190 = vld [vmem:[%s1 + $0x1c8] sm:$0xf]
  %v191 = vld [vmem:[%s1 + $0x1cc] sm:$0xf]
  %v192 = vld [vmem:[%s1 + $0x1d0] sm:$0xf]
  %v193 = vld [vmem:[%s1 + $0x1d4] sm:$0xf]
  %v194 = vld [vmem:[%s1 + $0x1d8] sm:$0xf]
  %v195 = vld [vmem:[%s1 + $0x1dc] sm:$0xf]
  %v196 = vld [vmem:[%s1 + $0x1e0] sm:$0xf]
  %v197 = vld [vmem:[%s1 + $0x1e4] sm:$0xf]
  %v198 = vld [vmem:[%s1 + $0x1e8] sm:$0xf]
  %v199 = vld [vmem:[%s1 + $0x1ec] sm:$0xf]
  %v200 = vld [vmem:[%s1 + $0x1f0] sm:$0xf]
  %v201 = vld [vmem:[%s1 + $0x1f4] sm:$0xf]
  %v202 = vld [vmem:[%s1 + $0x1f8] sm:$0xf]
  %v203 = vld [vmem:[%s1 + $0x1fc] sm:$0xf]
  %v260 = vunpack.c.l.b16 %v20
  %v261 = vunpack.c.h.b16 %v20
  %v262 = vunpack.c.l.b16 %v21
  %v263 = vunpack.c.h.b16 %v21
  %v264 = vunpack.c.l.b16 %v22
  %v265 = vunpack.c.h.b16 %v22
  %v266 = vunpack.c.l.b16 %v23
  %v267 = vunpack.c.h.b16 %v23
  %v268 = vunpack.c.l.b16 %v24
  %v269 = vunpack.c.h.b16 %v24
  %v270 = vunpack.c.l.b16 %v25
  %v271 = vunpack.c.h.b16 %v25
  %v272 = vunpack.c.l.b16 %v26
  %v273 = vunpack.c.h.b16 %v26
  %v274 = vunpack.c.l.b16 %v27
  %v275 = vunpack.c.h.b16 %v27
  %v276 = vunpack.c.l.b16 %v28
  %v277 = vunpack.c.h.b16 %v28
  %v278 = vunpack.c.l.b16 %v29
  %v279 = vunpack.c.h.b16 %v29
  %v280 = vunpack.c.l.b16 %v30
  %v281 = vunpack.c.h.b16 %v30
  %v282 = vunpack.c.l.b16 %v31
  %v283 = vunpack.c.h.b16 %v31
  %v284 = vunpack.c.l.b16 %v32
  %v285 = vunpack.c.h.b16 %v32
  %v286 = vunpack.c.l.b16 %v33
  %v287 = vunpack.c.h.b16 %v33
  %v288 = vunpack.c.l.b16 %v34
  %v289 = vunpack.c.h.b16 %v34
  %v290 = vunpack.c.l.b16 %v35
  %v291 = vunpack.c.h.b16 %v35
  %v292 = vunpack.c.l.b16 %v36
  %v293 = vunpack.c.h.b16 %v36
  %v294 = vunpack.c.l.b16 %v37
  %v295 = vunpack.c.h.b16 %v37
  %v296 = vunpack.c.l.b16 %v38
  %v297 = vunpack.c.h.b16 %v38
  %v298 = vunpack.c.l.b16 %v39
  %v299 = vunpack.c.h.b16 %v39
  %v300 = vunpack.c.l.b16 %v40
  %v301 = vunpack.c.h.b16 %v40
  %v302 = vunpack.c.l.b16 %v41
  %v303 = vunpack.c.h.b16 %v41
  %v304 = vunpack.c.l.b16 %v42
  %v305 = vunpack.c.h.b16 %v42
  %v306 = vunpack.c.l.b16 %v43
  %v307 = vunpack.c.h.b16 %v43
  %v308 = vunpack.c.l.b16 %v44
  %v309 = vunpack.c.h.b16 %v44
  %v310 = vunpack.c.l.b16 %v45
  %v311 = vunpack.c.h.b16 %v45
  %v312 = vunpack.c.l.b16 %v46
  %v313 = vunpack.c.h.b16 %v46
  %v314 = vunpack.c.l.b16 %v47
  %v315 = vunpack.c.h.b16 %v47
  %v316 = vunpack.c.l.b16 %v48
  %v317 = vunpack.c.h.b16 %v48
  %v318 = vunpack.c.l.b16 %v49
  %v319 = vunpack.c.h.b16 %v49
  %v320 = vunpack.c.l.b16 %v50
  %v321 = vunpack.c.h.b16 %v50
  %v322 = vunpack.c.l.b16 %v51
  %v323 = vunpack.c.h.b16 %v51
  %v324 = vunpack.c.l.b16 %v52
  %v325 = vunpack.c.h.b16 %v52
  %v326 = vunpack.c.l.b16 %v53
  %v327 = vunpack.c.h.b16 %v53
  %v328 = vunpack.c.l.b16 %v54
  %v329 = vunpack.c.h.b16 %v54
  %v330 = vunpack.c.l.b16 %v55
  %v331 = vunpack.c.h.b16 %v55
  %v332 = vunpack.c.l.b16 %v56
  %v333 = vunpack.c.h.b16 %v56
  %v334 = vunpack.c.l.b16 %v57
  %v335 = vunpack.c.h.b16 %v57
  %v336 = vunpack.c.l.b16 %v58
  %v337 = vunpack.c.h.b16 %v58
  %v338 = vunpack.c.l.b16 %v59
  %v339 = vunpack.c.h.b16 %v59
  %v340 = vunpack.c.l.b16 %v60
  %v341 = vunpack.c.h.b16 %v60
  %v342 = vunpack.c.l.b16 %v61
  %v343 = vunpack.c.h.b16 %v61
  %v344 = vunpack.c.l.b16 %v62
  %v345 = vunpack.c.h.b16 %v62
  %v346 = vunpack.c.l.b16 %v63
  %v347 = vunpack.c.h.b16 %v63
  %v348 = vunpack.c.l.b16 %v64
  %v349 = vunpack.c.h.b16 %v64
  %v350 = vunpack.c.l.b16 %v65
  %v351 = vunpack.c.h.b16 %v65
  %v352 = vunpack.c.l.b16 %v66
  %v353 = vunpack.c.h.b16 %v66
  %v354 = vunpack.c.l.b16 %v67
  %v355 = vunpack.c.h.b16 %v67
  %v356 = vunpack.c.l.b16 %v68
  %v357 = vunpack.c.h.b16 %v68
  %v358 = vunpack.c.l.b16 %v69
  %v359 = vunpack.c.h.b16 %v69
  %v360 = vunpack.c.l.b16 %v70
  %v361 = vunpack.c.h.b16 %v70
  %v362 = vunpack.c.l.b16 %v71
  %v363 = vunpack.c.h.b16 %v71
  %v364 = vunpack.c.l.b16 %v72
  %v365 = vunpack.c.h.b16 %v72
  %v366 = vunpack.c.l.b16 %v73
  %v367 = vunpack.c.h.b16 %v73
  %v368 = vunpack.c.l.b16 %v74
  %v369 = vunpack.c.h.b16 %v74
  %v370 = vunpack.c.l.b16 %v75
  %v371 = vunpack.c.h.b16 %v75
  %v372 = vpack.c.b16 %v268, %v260
  %v373 = vpack.c.b16 %v269, %v261
  %v374 = vpack.c.b16 %v270, %v262
  %v375 = vpack.c.b16 %v271, %v263
  %v376 = vpack.c.b16 %v272, %v264
  %v377 = vpack.c.b16 %v273, %v265
  %v378 = vpack.c.b16 %v274, %v266
  %v379 = vpack.c.b16 %v275, %v267
  %v380 = vpack.c.b16 %v284, %v276
  %v381 = vpack.c.b16 %v285, %v277
  %v382 = vpack.c.b16 %v286, %v278
  %v383 = vpack.c.b16 %v287, %v279
  %v384 = vpack.c.b16 %v288, %v280
  %v385 = vpack.c.b16 %v289, %v281
  %v386 = vpack.c.b16 %v290, %v282
  %v387 = vpack.c.b16 %v291, %v283
  %v388 = vpack.c.b16 %v300, %v292
  %v389 = vpack.c.b16 %v301, %v293
  %v390 = vpack.c.b16 %v302, %v294
  %v391 = vpack.c.b16 %v303, %v295
  %v392 = vpack.c.b16 %v304, %v296
  %v393 = vpack.c.b16 %v305, %v297
  %v394 = vpack.c.b16 %v306, %v298
  %v395 = vpack.c.b16 %v307, %v299
  %v396 = vpack.c.b16 %v316, %v308
  %v397 = vpack.c.b16 %v317, %v309
  %v398 = vpack.c.b16 %v318, %v310
  %v399 = vpack.c.b16 %v319, %v311
  %v400 = vpack.c.b16 %v320, %v312
  %v401 = vpack.c.b16 %v321, %v313
  %v402 = vpack.c.b16 %v322, %v314
  %v403 = vpack.c.b16 %v323, %v315
  %v404 = vpack.c.b16 %v332, %v324
  %v405 = vpack.c.b16 %v333, %v325
  %v406 = vpack.c.b16 %v334, %v326
  %v407 = vpack.c.b16 %v335, %v327
  %v408 = vpack.c.b16 %v336, %v328
  %v409 = vpack.c.b16 %v337, %v329
  %v410 = vpack.c.b16 %v338, %v330
  %v411 = vpack.c.b16 %v339, %v331
  %v412 = vpack.c.b16 %v348, %v340
  %v413 = vpack.c.b16 %v349, %v341
  %v414 = vpack.c.b16 %v350, %v342
  %v415 = vpack.c.b16 %v351, %v343
  %v416 = vpack.c.b16 %v352, %v344
  %v417 = vpack.c.b16 %v353, %v345
  %v418 = vpack.c.b16 %v354, %v346
  %v419 = vpack.c.b16 %v355, %v347
  %v420 = vpack.c.b16 %v364, %v356
  %v421 = vpack.c.b16 %v365, %v357
  %v422 = vpack.c.b16 %v366, %v358
  %v423 = vpack.c.b16 %v367, %v359
  %v424 = vpack.c.b16 %v368, %v360
  %v425 = vpack.c.b16 %v369, %v361
  %v426 = vpack.c.b16 %v370, %v362
  %v427 = vpack.c.b16 %v371, %v363
  %v612 = vunpack.c.l.b16 %v76
  %v613 = vunpack.c.l.b16 %v77
  %v614 = vunpack.c.l.b16 %v78
  %v615 = vunpack.c.l.b16 %v79
  %v616 = vunpack.c.l.b16 %v80
  %v617 = vunpack.c.l.b16 %v81
  %v618 = vunpack.c.l.b16 %v82
  %v619 = vunpack.c.l.b16 %v83
  %v620 = vunpack.c.l.b16 %v84
  %v621 = vunpack.c.l.b16 %v85
  %v622 = vunpack.c.l.b16 %v86
  %v623 = vunpack.c.l.b16 %v87
  %v624 = vunpack.c.l.b16 %v88
  %v625 = vunpack.c.l.b16 %v89
  %v626 = vunpack.c.l.b16 %v90
  %v627 = vunpack.c.l.b16 %v91
  %v628 = vunpack.c.l.b16 %v92
  %v629 = vunpack.c.l.b16 %v93
  %v630 = vunpack.c.l.b16 %v94
  %v631 = vunpack.c.l.b16 %v95
  %v632 = vunpack.c.l.b16 %v96
  %v633 = vunpack.c.l.b16 %v97
  %v634 = vunpack.c.l.b16 %v98
  %v635 = vunpack.c.l.b16 %v99
  %v636 = vunpack.c.l.b16 %v100
  %v637 = vunpack.c.l.b16 %v101
  %v638 = vunpack.c.l.b16 %v102
  %v639 = vunpack.c.l.b16 %v103
  %v640 = vunpack.c.l.b16 %v104
  %v641 = vunpack.c.l.b16 %v105
  %v642 = vunpack.c.l.b16 %v106
  %v643 = vunpack.c.l.b16 %v107
  %v644 = vunpack.c.l.b16 %v108
  %v645 = vunpack.c.l.b16 %v109
  %v646 = vunpack.c.l.b16 %v110
  %v647 = vunpack.c.l.b16 %v111
  %v648 = vunpack.c.l.b16 %v112
  %v649 = vunpack.c.l.b16 %v113
  %v650 = vunpack.c.l.b16 %v114
  %v651 = vunpack.c.l.b16 %v115
  %v652 = vunpack.c.l.b16 %v116
  %v653 = vunpack.c.l.b16 %v117
  %v654 = vunpack.c.l.b16 %v118
  %v655 = vunpack.c.l.b16 %v119
  %v656 = vunpack.c.l.b16 %v120
  %v657 = vunpack.c.l.b16 %v121
  %v658 = vunpack.c.l.b16 %v122
  %v659 = vunpack.c.l.b16 %v123
  %v660 = vunpack.c.l.b16 %v124
  %v661 = vunpack.c.l.b16 %v125
  %v662 = vunpack.c.l.b16 %v126
  %v663 = vunpack.c.l.b16 %v127
  %v664 = vunpack.c.l.b16 %v128
  %v665 = vunpack.c.l.b16 %v129
  %v666 = vunpack.c.l.b16 %v130
  %v667 = vunpack.c.l.b16 %v131
  %v668 = vunpack.c.l.b16 %v132
  %v669 = vunpack.c.l.b16 %v133
  %v670 = vunpack.c.l.b16 %v134
  %v671 = vunpack.c.l.b16 %v135
  %v672 = vunpack.c.l.b16 %v136
  %v673 = vunpack.c.l.b16 %v137
  %v674 = vunpack.c.l.b16 %v138
  %v675 = vunpack.c.l.b16 %v139
  %v676 = vunpack.c.l.b16 %v140
  %v677 = vunpack.c.l.b16 %v141
  %v678 = vunpack.c.l.b16 %v142
  %v679 = vunpack.c.l.b16 %v143
  %v680 = vunpack.c.l.b16 %v144
  %v681 = vunpack.c.l.b16 %v145
  %v682 = vunpack.c.l.b16 %v146
  %v683 = vunpack.c.l.b16 %v147
  %v684 = vunpack.c.l.b16 %v148
  %v685 = vunpack.c.l.b16 %v149
  %v686 = vunpack.c.l.b16 %v150
  %v687 = vunpack.c.l.b16 %v151
  %v688 = vunpack.c.l.b16 %v152
  %v689 = vunpack.c.l.b16 %v153
  %v690 = vunpack.c.l.b16 %v154
  %v691 = vunpack.c.l.b16 %v155
  %v692 = vunpack.c.l.b16 %v156
  %v693 = vunpack.c.l.b16 %v157
  %v694 = vunpack.c.l.b16 %v158
  %v695 = vunpack.c.l.b16 %v159
  %v696 = vunpack.c.l.b16 %v160
  %v697 = vunpack.c.l.b16 %v161
  %v698 = vunpack.c.l.b16 %v162
  %v699 = vunpack.c.l.b16 %v163
  %v700 = vunpack.c.l.b16 %v164
  %v701 = vunpack.c.l.b16 %v165
  %v702 = vunpack.c.l.b16 %v166
  %v703 = vunpack.c.l.b16 %v167
  %v704 = vunpack.c.l.b16 %v168
  %v705 = vunpack.c.l.b16 %v169
  %v706 = vunpack.c.l.b16 %v170
  %v707 = vunpack.c.l.b16 %v171
  %v708 = vunpack.c.l.b16 %v172
  %v709 = vunpack.c.l.b16 %v173
  %v710 = vunpack.c.l.b16 %v174
  %v711 = vunpack.c.l.b16 %v175
  %v712 = vunpack.c.l.b16 %v176
  %v713 = vunpack.c.l.b16 %v177
  %v714 = vunpack.c.l.b16 %v178
  %v715 = vunpack.c.l.b16 %v179
  %v716 = vunpack.c.l.b16 %v180
  %v717 = vunpack.c.l.b16 %v181
  %v718 = vunpack.c.l.b16 %v182
  %v719 = vunpack.c.l.b16 %v183
  %v720 = vunpack.c.l.b16 %v184
  %v721 = vunpack.c.l.b16 %v185
  %v722 = vunpack.c.l.b16 %v186
  %v723 = vunpack.c.l.b16 %v187
  %v724 = vunpack.c.l.b16 %v188
  %v725 = vunpack.c.l.b16 %v189
  %v726 = vunpack.c.l.b16 %v190
  %v727 = vunpack.c.l.b16 %v191
  %v728 = vunpack.c.l.b16 %v192
  %v729 = vunpack.c.l.b16 %v193
  %v730 = vunpack.c.l.b16 %v194
  %v731 = vunpack.c.l.b16 %v195
  %v732 = vunpack.c.l.b16 %v196
  %v733 = vunpack.c.l.b16 %v197
  %v734 = vunpack.c.l.b16 %v198
  %v735 = vunpack.c.l.b16 %v199
  %v736 = vunpack.c.l.b16 %v200
  %v737 = vunpack.c.l.b16 %v201
  %v738 = vunpack.c.l.b16 %v202
  %v739 = vunpack.c.l.b16 %v203
  %v740 = vpack.c.b16 %v613, %v612
  %v741 = vpack.c.b16 %v615, %v614
  %v742 = vpack.c.b16 %v617, %v616
  %v743 = vpack.c.b16 %v619, %v618
  %v744 = vpack.c.b16 %v621, %v620
  %v745 = vpack.c.b16 %v623, %v622
  %v746 = vpack.c.b16 %v625, %v624
  %v747 = vpack.c.b16 %v627, %v626
  %v748 = vpack.c.b16 %v629, %v628
  %v749 = vpack.c.b16 %v631, %v630
  %v750 = vpack.c.b16 %v633, %v632
  %v751 = vpack.c.b16 %v635, %v634
  %v752 = vpack.c.b16 %v637, %v636
  %v753 = vpack.c.b16 %v639, %v638
  %v754 = vpack.c.b16 %v641, %v640
  %v755 = vpack.c.b16 %v643, %v642
  %v756 = vpack.c.b16 %v645, %v644
  %v757 = vpack.c.b16 %v647, %v646
  %v758 = vpack.c.b16 %v649, %v648
  %v759 = vpack.c.b16 %v651, %v650
  %v760 = vpack.c.b16 %v653, %v652
  %v761 = vpack.c.b16 %v655, %v654
  %v762 = vpack.c.b16 %v657, %v656
  %v763 = vpack.c.b16 %v659, %v658
  %v764 = vpack.c.b16 %v661, %v660
  %v765 = vpack.c.b16 %v663, %v662
  %v766 = vpack.c.b16 %v665, %v664
  %v767 = vpack.c.b16 %v667, %v666
  %v768 = vpack.c.b16 %v669, %v668
  %v769 = vpack.c.b16 %v671, %v670
  %v770 = vpack.c.b16 %v673, %v672
  %v771 = vpack.c.b16 %v675, %v674
  %v772 = vpack.c.b16 %v677, %v676
  %v773 = vpack.c.b16 %v679, %v678
  %v774 = vpack.c.b16 %v681, %v680
  %v775 = vpack.c.b16 %v683, %v682
  %v776 = vpack.c.b16 %v685, %v684
  %v777 = vpack.c.b16 %v687, %v686
  %v778 = vpack.c.b16 %v689, %v688
  %v779 = vpack.c.b16 %v691, %v690
  %v780 = vpack.c.b16 %v693, %v692
  %v781 = vpack.c.b16 %v695, %v694
  %v782 = vpack.c.b16 %v697, %v696
  %v783 = vpack.c.b16 %v699, %v698
  %v784 = vpack.c.b16 %v701, %v700
  %v785 = vpack.c.b16 %v703, %v702
  %v786 = vpack.c.b16 %v705, %v704
  %v787 = vpack.c.b16 %v707, %v706
  %v788 = vpack.c.b16 %v709, %v708
  %v789 = vpack.c.b16 %v711, %v710
  %v790 = vpack.c.b16 %v713, %v712
  %v791 = vpack.c.b16 %v715, %v714
  %v792 = vpack.c.b16 %v717, %v716
  %v793 = vpack.c.b16 %v719, %v718
  %v794 = vpack.c.b16 %v721, %v720
  %v795 = vpack.c.b16 %v723, %v722
  %v796 = vpack.c.b16 %v725, %v724
  %v797 = vpack.c.b16 %v727, %v726
  %v798 = vpack.c.b16 %v729, %v728
  %v799 = vpack.c.b16 %v731, %v730
  %v800 = vpack.c.b16 %v733, %v732
  %v801 = vpack.c.b16 %v735, %v734
  %v802 = vpack.c.b16 %v737, %v736
  %v803 = vpack.c.b16 %v739, %v738
  %868 = vmatpush.bf16.msra.mxu0 %v747
  %869 = vmatpush.bf16.msra.mxu0 %v746
  %870 = vmatpush.bf16.msra.mxu0 %v745
  %871 = vmatpush.bf16.msra.mxu0 %v744
  %872 = vmatpush.bf16.msra.mxu0 %v743
  %873 = vmatpush.bf16.msra.mxu0 %v742
  %874 = vmatpush.bf16.msra.mxu0 %v741
  %875 = vmatpush.bf16.msra.mxu0 %v740
  %876 = vmatmul.bf16.gmra.mxu0 %v372
  %v877 = vpop.f32.mrf.mxu0
  %v878 = vadd.f32 0.0, %v877
  %v879 = vpop.f32.mrf.mxu0
  %v880 = vadd.f32 0.0, %v879
  %881 = vmatmul.bf16.gmra.mxu0 %v380
  %v882 = vpop.f32.mrf.mxu0
  %v883 = vadd.f32 0.0, %v882
  %v884 = vpop.f32.mrf.mxu0
  %v885 = vadd.f32 0.0, %v884
  %886 = vmatmul.bf16.gmra.mxu0 %v388
  %v887 = vpop.f32.mrf.mxu0
  %v888 = vadd.f32 0.0, %v887
  %v889 = vpop.f32.mrf.mxu0
  %v890 = vadd.f32 0.0, %v889
  %891 = vmatmul.bf16.gmra.mxu0 %v396
  %v892 = vpop.f32.mrf.mxu0
  %v893 = vadd.f32 0.0, %v892
  %v894 = vpop.f32.mrf.mxu0
  %v895 = vadd.f32 0.0, %v894
  %896 = vmatmul.bf16.gmra.mxu0 %v404
  %v897 = vpop.f32.mrf.mxu0
  %v898 = vadd.f32 0.0, %v897
  %v899 = vpop.f32.mrf.mxu0
  %v900 = vadd.f32 0.0, %v899
  %901 = vmatmul.bf16.gmra.mxu0 %v412
  %v902 = vpop.f32.mrf.mxu0
  %v903 = vadd.f32 0.0, %v902
  %v904 = vpop.f32.mrf.mxu0
  %v905 = vadd.f32 0.0, %v904
  %906 = vmatmul.bf16.gmra.mxu0 %v420
  %v907 = vpop.f32.mrf.mxu0
  %v908 = vadd.f32 0.0, %v907
  %v909 = vpop.f32.mrf.mxu0
  %v910 = vadd.f32 0.0, %v909
  %911 = vdwg.mxu0
  %912 = vmatpush.bf16.msra.mxu0 %v755
  %913 = vmatpush.bf16.msra.mxu0 %v754
  %914 = vmatpush.bf16.msra.mxu0 %v753
  %915 = vmatpush.bf16.msra.mxu0 %v752
  %916 = vmatpush.bf16.msra.mxu0 %v751
  %917 = vmatpush.bf16.msra.mxu0 %v750
  %918 = vmatpush.bf16.msra.mxu0 %v749
  %919 = vmatpush.bf16.msra.mxu0 %v748
  %920 = vmatmul.bf16.gmra.mxu0 %v373
  %v921 = vpop.f32.mrf.mxu0
  %v922 = vadd.f32 %v878, %v921
  %v923 = vpop.f32.mrf.mxu0
  %v924 = vadd.f32 %v880, %v923
  %925 = vmatmul.bf16.gmra.mxu0 %v381
  %v926 = vpop.f32.mrf.mxu0
  %v927 = vadd.f32 %v883, %v926
  %v928 = vpop.f32.mrf.mxu0
  %v929 = vadd.f32 %v885, %v928
  %930 = vmatmul.bf16.gmra.mxu0 %v389
  %v931 = vpop.f32.mrf.mxu0
  %v932 = vadd.f32 %v888, %v931
  %v933 = vpop.f32.mrf.mxu0
  %v934 = vadd.f32 %v890, %v933
  %935 = vmatmul.bf16.gmra.mxu0 %v397
  %v936 = vpop.f32.mrf.mxu0
  %v937 = vadd.f32 %v893, %v936
  %v938 = vpop.f32.mrf.mxu0
  %v939 = vadd.f32 %v895, %v938
  %940 = vmatmul.bf16.gmra.mxu0 %v405
  %v941 = vpop.f32.mrf.mxu0
  %v942 = vadd.f32 %v898, %v941
  %v943 = vpop.f32.mrf.mxu0
  %v944 = vadd.f32 %v900, %v943
  %945 = vmatmul.bf16.gmra.mxu0 %v413
  %v946 = vpop.f32.mrf.mxu0
  %v947 = vadd.f32 %v903, %v946
  %v948 = vpop.f32.mrf.mxu0
  %v949 = vadd.f32 %v905, %v948
  %950 = vmatmul.bf16.gmra.mxu0 %v421
  %v951 = vpop.f32.mrf.mxu0
  %v952 = vadd.f32 %v908, %v951
  %v953 = vpop.f32.mrf.mxu0
  %v954 = vadd.f32 %v910, %v953
  %955 = vdwg.mxu0
  %956 = vmatpush.bf16.msra.mxu0 %v763
  %957 = vmatpush.bf16.msra.mxu0 %v762
  %958 = vmatpush.bf16.msra.mxu0 %v761
  %959 = vmatpush.bf16.msra.mxu0 %v760
  %960 = vmatpush.bf16.msra.mxu0 %v759
  %961 = vmatpush.bf16.msra.mxu0 %v758
  %962 = vmatpush.bf16.msra.mxu0 %v757
  %963 = vmatpush.bf16.msra.mxu0 %v756
  %964 = vmatmul.bf16.gmra.mxu0 %v374
  %v965 = vpop.f32.mrf.mxu0
  %v966 = vadd.f32 %v922, %v965
  %v967 = vpop.f32.mrf.mxu0
  %v968 = vadd.f32 %v924, %v967
  %969 = vmatmul.bf16.gmra.mxu0 %v382
  %v970 = vpop.f32.mrf.mxu0
  %v971 = vadd.f32 %v927, %v970
  %v972 = vpop.f32.mrf.mxu0
  %v973 = vadd.f32 %v929, %v972
  %974 = vmatmul.bf16.gmra.mxu0 %v390
  %v975 = vpop.f32.mrf.mxu0
  %v976 = vadd.f32 %v932, %v975
  %v977 = vpop.f32.mrf.mxu0
  %v978 = vadd.f32 %v934, %v977
  %979 = vmatmul.bf16.gmra.mxu0 %v398
  %v980 = vpop.f32.mrf.mxu0
  %v981 = vadd.f32 %v937, %v980
  %v982 = vpop.f32.mrf.mxu0
  %v983 = vadd.f32 %v939, %v982
  %984 = vmatmul.bf16.gmra.mxu0 %v406
  %v985 = vpop.f32.mrf.mxu0
  %v986 = vadd.f32 %v942, %v985
  %v987 = vpop.f32.mrf.mxu0
  %v988 = vadd.f32 %v944, %v987
  %989 = vmatmul.bf16.gmra.mxu0 %v414
  %v990 = vpop.f32.mrf.mxu0
  %v991 = vadd.f32 %v947, %v990
  %v992 = vpop.f32.mrf.mxu0
  %v993 = vadd.f32 %v949, %v992
  %994 = vmatmul.bf16.gmra.mxu0 %v422
  %v995 = vpop.f32.mrf.mxu0
  %v996 = vadd.f32 %v952, %v995
  %v997 = vpop.f32.mrf.mxu0
  %v998 = vadd.f32 %v954, %v997
  %999 = vdwg.mxu0
  %1000 = vmatpush.bf16.msra.mxu0 %v771
  %1001 = vmatpush.bf16.msra.mxu0 %v770
  %1002 = vmatpush.bf16.msra.mxu0 %v769
  %1003 = vmatpush.bf16.msra.mxu0 %v768
  %1004 = vmatpush.bf16.msra.mxu0 %v767
  %1005 = vmatpush.bf16.msra.mxu0 %v766
  %1006 = vmatpush.bf16.msra.mxu0 %v765
  %1007 = vmatpush.bf16.msra.mxu0 %v764
  %1008 = vmatmul.bf16.gmra.mxu0 %v375
  %v1009 = vpop.f32.mrf.mxu0
  %v1010 = vadd.f32 %v966, %v1009
  %v1011 = vpop.f32.mrf.mxu0
  %v1012 = vadd.f32 %v968, %v1011
  %1013 = vmatmul.bf16.gmra.mxu0 %v383
  %v1014 = vpop.f32.mrf.mxu0
  %v1015 = vadd.f32 %v971, %v1014
  %v1016 = vpop.f32.mrf.mxu0
  %v1017 = vadd.f32 %v973, %v1016
  %1018 = vmatmul.bf16.gmra.mxu0 %v391
  %v1019 = vpop.f32.mrf.mxu0
  %v1020 = vadd.f32 %v976, %v1019
  %v1021 = vpop.f32.mrf.mxu0
  %v1022 = vadd.f32 %v978, %v1021
  %1023 = vmatmul.bf16.gmra.mxu0 %v399
  %v1024 = vpop.f32.mrf.mxu0
  %v1025 = vadd.f32 %v981, %v1024
  %v1026 = vpop.f32.mrf.mxu0
  %v1027 = vadd.f32 %v983, %v1026
  %1028 = vmatmul.bf16.gmra.mxu0 %v407
  %v1029 = vpop.f32.mrf.mxu0
  %v1030 = vadd.f32 %v986, %v1029
  %v1031 = vpop.f32.mrf.mxu0
  %v1032 = vadd.f32 %v988, %v1031
  %1033 = vmatmul.bf16.gmra.mxu0 %v415
  %v1034 = vpop.f32.mrf.mxu0
  %v1035 = vadd.f32 %v991, %v1034
  %v1036 = vpop.f32.mrf.mxu0
  %v1037 = vadd.f32 %v993, %v1036
  %1038 = vmatmul.bf16.gmra.mxu0 %v423
  %v1039 = vpop.f32.mrf.mxu0
  %v1040 = vadd.f32 %v996, %v1039
  %v1041 = vpop.f32.mrf.mxu0
  %v1042 = vadd.f32 %v998, %v1041
  %1043 = vdwg.mxu0
  %1044 = vmatpush.bf16.msra.mxu0 %v779
  %1045 = vmatpush.bf16.msra.mxu0 %v778
  %1046 = vmatpush.bf16.msra.mxu0 %v777
  %1047 = vmatpush.bf16.msra.mxu0 %v776
  %1048 = vmatpush.bf16.msra.mxu0 %v775
  %1049 = vmatpush.bf16.msra.mxu0 %v774
  %1050 = vmatpush.bf16.msra.mxu0 %v773
  %1051 = vmatpush.bf16.msra.mxu0 %v772
  %1052 = vmatmul.bf16.gmra.mxu0 %v376
  %v1053 = vpop.f32.mrf.mxu0
  %v1054 = vadd.f32 %v1010, %v1053
  %v1055 = vpop.f32.mrf.mxu0
  %v1056 = vadd.f32 %v1012, %v1055
  %1057 = vmatmul.bf16.gmra.mxu0 %v384
  %v1058 = vpop.f32.mrf.mxu0
  %v1059 = vadd.f32 %v1015, %v1058
  %v1060 = vpop.f32.mrf.mxu0
  %v1061 = vadd.f32 %v1017, %v1060
  %1062 = vmatmul.bf16.gmra.mxu0 %v392
  %v1063 = vpop.f32.mrf.mxu0
  %v1064 = vadd.f32 %v1020, %v1063
  %v1065 = vpop.f32.mrf.mxu0
  %v1066 = vadd.f32 %v1022, %v1065
  %1067 = vmatmul.bf16.gmra.mxu0 %v400
  %v1068 = vpop.f32.mrf.mxu0
  %v1069 = vadd.f32 %v1025, %v1068
  %v1070 = vpop.f32.mrf.mxu0
  %v1071 = vadd.f32 %v1027, %v1070
  %1072 = vmatmul.bf16.gmra.mxu0 %v408
  %v1073 = vpop.f32.mrf.mxu0
  %v1074 = vadd.f32 %v1030, %v1073
  %v1075 = vpop.f32.mrf.mxu0
  %v1076 = vadd.f32 %v1032, %v1075
  %1077 = vmatmul.bf16.gmra.mxu0 %v416
  %v1078 = vpop.f32.mrf.mxu0
  %v1079 = vadd.f32 %v1035, %v1078
  %v1080 = vpop.f32.mrf.mxu0
  %v1081 = vadd.f32 %v1037, %v1080
  %1082 = vmatmul.bf16.gmra.mxu0 %v424
  %v1083 = vpop.f32.mrf.mxu0
  %v1084 = vadd.f32 %v1040, %v1083
  %v1085 = vpop.f32.mrf.mxu0
  %v1086 = vadd.f32 %v1042, %v1085
  %1087 = vdwg.mxu0
  %1088 = vmatpush.bf16.msra.mxu0 %v787
  %1089 = vmatpush.bf16.msra.mxu0 %v786
  %1090 = vmatpush.bf16.msra.mxu0 %v785
  %1091 = vmatpush.bf16.msra.mxu0 %v784
  %1092 = vmatpush.bf16.msra.mxu0 %v783
  %1093 = vmatpush.bf16.msra.mxu0 %v782
  %1094 = vmatpush.bf16.msra.mxu0 %v781
  %1095 = vmatpush.bf16.msra.mxu0 %v780
  %1096 = vmatmul.bf16.gmra.mxu0 %v377
  %v1097 = vpop.f32.mrf.mxu0
  %v1098 = vadd.f32 %v1054, %v1097
  %v1099 = vpop.f32.mrf.mxu0
  %v1100 = vadd.f32 %v1056, %v1099
  %1101 = vmatmul.bf16.gmra.mxu0 %v385
  %v1102 = vpop.f32.mrf.mxu0
  %v1103 = vadd.f32 %v1059, %v1102
  %v1104 = vpop.f32.mrf.mxu0
  %v1105 = vadd.f32 %v1061, %v1104
  %1106 = vmatmul.bf16.gmra.mxu0 %v393
  %v1107 = vpop.f32.mrf.mxu0
  %v1108 = vadd.f32 %v1064, %v1107
  %v1109 = vpop.f32.mrf.mxu0
  %v1110 = vadd.f32 %v1066, %v1109
  %1111 = vmatmul.bf16.gmra.mxu0 %v401
  %v1112 = vpop.f32.mrf.mxu0
  %v1113 = vadd.f32 %v1069, %v1112
  %v1114 = vpop.f32.mrf.mxu0
  %v1115 = vadd.f32 %v1071, %v1114
  %1116 = vmatmul.bf16.gmra.mxu0 %v409
  %v1117 = vpop.f32.mrf.mxu0
  %v1118 = vadd.f32 %v1074, %v1117
  %v1119 = vpop.f32.mrf.mxu0
  %v1120 = vadd.f32 %v1076, %v1119
  %1121 = vmatmul.bf16.gmra.mxu0 %v417
  %v1122 = vpop.f32.mrf.mxu0
  %v1123 = vadd.f32 %v1079, %v1122
  %v1124 = vpop.f32.mrf.mxu0
  %v1125 = vadd.f32 %v1081, %v1124
  %1126 = vmatmul.bf16.gmra.mxu0 %v425
  %v1127 = vpop.f32.mrf.mxu0
  %v1128 = vadd.f32 %v1084, %v1127
  %v1129 = vpop.f32.mrf.mxu0
  %v1130 = vadd.f32 %v1086, %v1129
  %1131 = vdwg.mxu0
  %1132 = vmatpush.bf16.msra.mxu0 %v795
  %1133 = vmatpush.bf16.msra.mxu0 %v794
  %1134 = vmatpush.bf16.msra.mxu0 %v793
  %1135 = vmatpush.bf16.msra.mxu0 %v792
  %1136 = vmatpush.bf16.msra.mxu0 %v791
  %1137 = vmatpush.bf16.msra.mxu0 %v790
  %1138 = vmatpush.bf16.msra.mxu0 %v789
  %1139 = vmatpush.bf16.msra.mxu0 %v788
  %1140 = vmatmul.bf16.gmra.mxu0 %v378
  %v1141 = vpop.f32.mrf.mxu0
  %v1142 = vadd.f32 %v1098, %v1141
  %v1143 = vpop.f32.mrf.mxu0
  %v1144 = vadd.f32 %v1100, %v1143
  %1145 = vmatmul.bf16.gmra.mxu0 %v386
  %v1146 = vpop.f32.mrf.mxu0
  %v1147 = vadd.f32 %v1103, %v1146
  %v1148 = vpop.f32.mrf.mxu0
  %v1149 = vadd.f32 %v1105, %v1148
  %1150 = vmatmul.bf16.gmra.mxu0 %v394
  %v1151 = vpop.f32.mrf.mxu0
  %v1152 = vadd.f32 %v1108, %v1151
  %v1153 = vpop.f32.mrf.mxu0
  %v1154 = vadd.f32 %v1110, %v1153
  %1155 = vmatmul.bf16.gmra.mxu0 %v402
  %v1156 = vpop.f32.mrf.mxu0
  %v1157 = vadd.f32 %v1113, %v1156
  %v1158 = vpop.f32.mrf.mxu0
  %v1159 = vadd.f32 %v1115, %v1158
  %1160 = vmatmul.bf16.gmra.mxu0 %v410
  %v1161 = vpop.f32.mrf.mxu0
  %v1162 = vadd.f32 %v1118, %v1161
  %v1163 = vpop.f32.mrf.mxu0
  %v1164 = vadd.f32 %v1120, %v1163
  %1165 = vmatmul.bf16.gmra.mxu0 %v418
  %v1166 = vpop.f32.mrf.mxu0
  %v1167 = vadd.f32 %v1123, %v1166
  %v1168 = vpop.f32.mrf.mxu0
  %v1169 = vadd.f32 %v1125, %v1168
  %1170 = vmatmul.bf16.gmra.mxu0 %v426
  %v1171 = vpop.f32.mrf.mxu0
  %v1172 = vadd.f32 %v1128, %v1171
  %v1173 = vpop.f32.mrf.mxu0
  %v1174 = vadd.f32 %v1130, %v1173
  %1175 = vdwg.mxu0
  %1176 = vmatpush.bf16.msra.mxu0 %v803
  %1177 = vmatpush.bf16.msra.mxu0 %v802
  %1178 = vmatpush.bf16.msra.mxu0 %v801
  %1179 = vmatpush.bf16.msra.mxu0 %v800
  %1180 = vmatpush.bf16.msra.mxu0 %v799
  %1181 = vmatpush.bf16.msra.mxu0 %v798
  %1182 = vmatpush.bf16.msra.mxu0 %v797
  %1183 = vmatpush.bf16.msra.mxu0 %v796
  %1184 = vmatmul.bf16.gmra.mxu0 %v379
  %v1185 = vpop.f32.mrf.mxu0
  %v1186 = vadd.f32 %v1142, %v1185
  %v1187 = vpop.f32.mrf.mxu0
  %v1188 = vadd.f32 %v1144, %v1187
  %1189 = vmatmul.bf16.gmra.mxu0 %v387
  %v1190 = vpop.f32.mrf.mxu0
  %v1191 = vadd.f32 %v1147, %v1190
  %v1192 = vpop.f32.mrf.mxu0
  %v1193 = vadd.f32 %v1149, %v1192
  %1194 = vmatmul.bf16.gmra.mxu0 %v395
  %v1195 = vpop.f32.mrf.mxu0
  %v1196 = vadd.f32 %v1152, %v1195
  %v1197 = vpop.f32.mrf.mxu0
  %v1198 = vadd.f32 %v1154, %v1197
  %1199 = vmatmul.bf16.gmra.mxu0 %v403
  %v1200 = vpop.f32.mrf.mxu0
  %v1201 = vadd.f32 %v1157, %v1200
  %v1202 = vpop.f32.mrf.mxu0
  %v1203 = vadd.f32 %v1159, %v1202
  %1204 = vmatmul.bf16.gmra.mxu0 %v411
  %v1205 = vpop.f32.mrf.mxu0
  %v1206 = vadd.f32 %v1162, %v1205
  %v1207 = vpop.f32.mrf.mxu0
  %v1208 = vadd.f32 %v1164, %v1207
  %1209 = vmatmul.bf16.gmra.mxu0 %v419
  %v1210 = vpop.f32.mrf.mxu0
  %v1211 = vadd.f32 %v1167, %v1210
  %v1212 = vpop.f32.mrf.mxu0
  %v1213 = vadd.f32 %v1169, %v1212
  %1214 = vmatmul.bf16.gmra.mxu0 %v427
  %v1215 = vpop.f32.mrf.mxu0
  %v1216 = vadd.f32 %v1172, %v1215
  %v1217 = vpop.f32.mrf.mxu0
  %v1218 = vadd.f32 %v1174, %v1217
  %1219 = vdwg.mxu0
  %v1220 = vadd.f32 %v1186, %v1188
  %v1221 = vadd.f32 %v1220, %v1191
  %v1222 = vadd.f32 %v1221, %v1193
  %v1223 = vadd.f32 %v1222, %v1196
  %v1224 = vadd.f32 %v1223, %v1198
  %v1225 = vadd.f32 %v1224, %v1201
  %v1226 = vrot.slane %v1225, 4
  %v1227 = vadd.f32 %v1225, %v1226
  %v1228 = vrot.slane %v1227, 2
  %v1229 = vadd.f32 %v1227, %v1228
  %v1230 = vrot.slane %v1229, 1
  %v1231 = vadd.f32 %v1229, %v1230
  %v1232 = vadd.f32 %v1203, %v1206
  %v1233 = vadd.f32 %v1232, %v1208
  %v1234 = vadd.f32 %v1233, %v1211
  %v1235 = vadd.f32 %v1234, %v1213
  %v1236 = vadd.f32 %v1235, %v1216
  %v1237 = vadd.f32 %v1236, %v1218
  %v1238 = vrot.slane %v1237, 4
  %v1239 = vadd.f32 %v1237, %v1238
  %v1240 = vrot.slane %v1239, 2
  %v1241 = vadd.f32 %v1239, %v1240
  %v1242 = vrot.slane %v1241, 1
  %v1243 = vadd.f32 %v1241, %v1242
  %v1244 = vmul.f32 %v1231, 0.020408163
  %v1245 = vmul.f32 %v1243, 0.020408163
  %v1246 = vmul.f32 %v1186, %v1186
  %v1247 = vmul.f32 %v1188, %v1188
  %v1248 = vmul.f32 %v1191, %v1191
  %v1249 = vmul.f32 %v1193, %v1193
  %v1250 = vmul.f32 %v1196, %v1196
  %v1251 = vmul.f32 %v1198, %v1198
  %v1252 = vmul.f32 %v1201, %v1201
  %v1253 = vmul.f32 %v1203, %v1203
  %v1254 = vmul.f32 %v1206, %v1206
  %v1255 = vmul.f32 %v1208, %v1208
  %v1256 = vmul.f32 %v1211, %v1211
  %v1257 = vmul.f32 %v1213, %v1213
  %v1258 = vmul.f32 %v1216, %v1216
  %v1259 = vmul.f32 %v1218, %v1218
  %v1260 = vadd.f32 %v1246, %v1247
  %v1261 = vadd.f32 %v1260, %v1248
  %v1262 = vadd.f32 %v1261, %v1249
  %v1263 = vadd.f32 %v1262, %v1250
  %v1264 = vadd.f32 %v1263, %v1251
  %v1265 = vadd.f32 %v1264, %v1252
  %v1266 = vrot.slane %v1265, 4
  %v1267 = vadd.f32 %v1265, %v1266
  %v1268 = vrot.slane %v1267, 2
  %v1269 = vadd.f32 %v1267, %v1268
  %v1270 = vrot.slane %v1269, 1
  %v1271 = vadd.f32 %v1269, %v1270
  %v1272 = vadd.f32 %v1253, %v1254
  %v1273 = vadd.f32 %v1272, %v1255
  %v1274 = vadd.f32 %v1273, %v1256
  %v1275 = vadd.f32 %v1274, %v1257
  %v1276 = vadd.f32 %v1275, %v1258
  %v1277 = vadd.f32 %v1276, %v1259
  %v1278 = vrot.slane %v1277, 4
  %v1279 = vadd.f32 %v1277, %v1278
  %v1280 = vrot.slane %v1279, 2
  %v1281 = vadd.f32 %v1279, %v1280
  %v1282 = vrot.slane %v1281, 1
  %v1283 = vadd.f32 %v1281, %v1282
  %v1284 = vmul.f32 %v1271, 0.020408163
  %v1285 = vmul.f32 %v1283, 0.020408163
  %v1286 = vmul.f32 %v1244, %v1244
  %v1287 = vmul.f32 %v1245, %v1245
  %v1288 = vsub.f32 %v1284, %v1286
  %v1289 = vsub.f32 %v1285, %v1287
  %v1290 = vmax.f32 %v1288, 0.0
  %v1291 = vmax.f32 %v1289, 0.0
  %v1292 = vadd.f32 %v1290, 1e-05
  %v1293 = vadd.f32 %v1291, 1e-05
  %v1294 = vrsqrt.pop %v1292
  %v1295 = vmul.f32 %v1294, %v1292
  %v1296 = vmul.f32 %v1295, %v1294
  %v1297 = vmul.f32 0.5, %v1296
  %v1298 = vsub.f32 1.5, %v1297
  %v1299 = vmul.f32 %v1294, %v1298
  %vm1300 = vweird.f32 %v1292
  %vm1301 = vweird.f32 %v1294
  %vm1302 = vmor %vm1300, %vm1301
  %v1303 = vsel %vm1302, %v1294, %v1299
  %v1304 = vrsqrt.pop %v1293
  %v1305 = vmul.f32 %v1304, %v1293
  %v1306 = vmul.f32 %v1305, %v1304
  %v1307 = vmul.f32 0.5, %v1306
  %v1308 = vsub.f32 1.5, %v1307
  %v1309 = vmul.f32 %v1304, %v1308
  %vm1310 = vweird.f32 %v1293
  %vm1311 = vweird.f32 %v1304
  %vm1312 = vmor %vm1310, %vm1311
  %v1313 = vsel %vm1312, %v1304, %v1309
  %v1314 = vsub.f32 %v1186, %v1244
  %v1315 = vsub.f32 %v1188, %v1244
  %v1316 = vsub.f32 %v1191, %v1244
  %v1317 = vsub.f32 %v1193, %v1244
  %v1318 = vsub.f32 %v1196, %v1244
  %v1319 = vsub.f32 %v1198, %v1244
  %v1320 = vsub.f32 %v1201, %v1244
  %v1321 = vsub.f32 %v1203, %v1245
  %v1322 = vsub.f32 %v1206, %v1245
  %v1323 = vsub.f32 %v1208, %v1245
  %v1324 = vsub.f32 %v1211, %v1245
  %v1325 = vsub.f32 %v1213, %v1245
  %v1326 = vsub.f32 %v1216, %v1245
  %v1327 = vsub.f32 %v1218, %v1245
  %v1328 = vmul.f32 %v1314, %v1303
  %v1329 = vmul.f32 %v1315, %v1303
  %v1330 = vmul.f32 %v1316, %v1303
  %v1331 = vmul.f32 %v1317, %v1303
  %v1332 = vmul.f32 %v1318, %v1303
  %v1333 = vmul.f32 %v1319, %v1303
  %v1334 = vmul.f32 %v1320, %v1303
  %v1335 = vmul.f32 %v1321, %v1313
  %v1336 = vmul.f32 %v1322, %v1313
  %v1337 = vmul.f32 %v1323, %v1313
  %v1338 = vmul.f32 %v1324, %v1313
  %v1339 = vmul.f32 %v1325, %v1313
  %v1340 = vmul.f32 %v1326, %v1313
  %v1341 = vmul.f32 %v1327, %v1313
  %v1342 = vld [vmem:[%s2] sm:$0x1]
  %v1344 = vperm.slane %v1342, 0
  %v1346 = vmul.f32 %v1328, %v1344
  %v1347 = vmul.f32 %v1329, %v1344
  %v1348 = vmul.f32 %v1330, %v1344
  %v1349 = vmul.f32 %v1331, %v1344
  %v1350 = vmul.f32 %v1332, %v1344
  %v1351 = vmul.f32 %v1333, %v1344
  %v1352 = vmul.f32 %v1334, %v1344
  %v1353 = vmul.f32 %v1335, %v1344
  %v1354 = vmul.f32 %v1336, %v1344
  %v1355 = vmul.f32 %v1337, %v1344
  %v1356 = vmul.f32 %v1338, %v1344
  %v1357 = vmul.f32 %v1339, %v1344
  %v1358 = vmul.f32 %v1340, %v1344
  %v1359 = vmul.f32 %v1341, %v1344
  %v1360 = vld [vmem:[%s3] sm:$0x1]
  %v1362 = vperm.slane %v1360, 0
  %v1364 = vadd.f32 %v1346, %v1362
  %v1365 = vadd.f32 %v1347, %v1362
  %v1366 = vadd.f32 %v1348, %v1362
  %v1367 = vadd.f32 %v1349, %v1362
  %v1368 = vadd.f32 %v1350, %v1362
  %v1369 = vadd.f32 %v1351, %v1362
  %v1370 = vadd.f32 %v1352, %v1362
  %v1371 = vadd.f32 %v1353, %v1362
  %v1372 = vadd.f32 %v1354, %v1362
  %v1373 = vadd.f32 %v1355, %v1362
  %v1374 = vadd.f32 %v1356, %v1362
  %v1375 = vadd.f32 %v1357, %v1362
  %v1376 = vadd.f32 %v1358, %v1362
  %v1377 = vadd.f32 %v1359, %v1362
  %vm1378 = vcmp.gt.f32.partialorder %v1364, 0.0
  %vm1379 = vcmp.gt.f32.partialorder %v1365, 0.0
  %vm1380 = vcmp.gt.f32.partialorder %v1366, 0.0
  %vm1381 = vcmp.gt.f32.partialorder %v1367, 0.0
  %vm1382 = vcmp.gt.f32.partialorder %v1368, 0.0
  %vm1383 = vcmp.gt.f32.partialorder %v1369, 0.0
  %vm1384 = vcmp.gt.f32.partialorder %v1370, 0.0
  %vm1385 = vcmp.gt.f32.partialorder %v1371, 0.0
  %vm1386 = vcmp.gt.f32.partialorder %v1372, 0.0
  %vm1387 = vcmp.gt.f32.partialorder %v1373, 0.0
  %vm1388 = vcmp.gt.f32.partialorder %v1374, 0.0
  %vm1389 = vcmp.gt.f32.partialorder %v1375, 0.0
  %vm1390 = vcmp.gt.f32.partialorder %v1376, 0.0
  %vm1391 = vcmp.gt.f32.partialorder %v1377, 0.0
  %v1392 = vmul.f32 %v1364, 0.2
  %v1393 = vmul.f32 %v1365, 0.2
  %v1394 = vmul.f32 %v1366, 0.2
  %v1395 = vmul.f32 %v1367, 0.2
  %v1396 = vmul.f32 %v1368, 0.2
  %v1397 = vmul.f32 %v1369, 0.2
  %v1398 = vmul.f32 %v1370, 0.2
  %v1399 = vmul.f32 %v1371, 0.2
  %v1400 = vmul.f32 %v1372, 0.2
  %v1401 = vmul.f32 %v1373, 0.2
  %v1402 = vmul.f32 %v1374, 0.2
  %v1403 = vmul.f32 %v1375, 0.2
  %v1404 = vmul.f32 %v1376, 0.2
  %v1405 = vmul.f32 %v1377, 0.2
  %v1406 = vsel %vm1378, %v1364, %v1392
  %v1407 = vsel %vm1379, %v1365, %v1393
  %v1408 = vsel %vm1380, %v1366, %v1394
  %v1409 = vsel %vm1381, %v1367, %v1395
  %v1410 = vsel %vm1382, %v1368, %v1396
  %v1411 = vsel %vm1383, %v1369, %v1397
  %v1412 = vsel %vm1384, %v1370, %v1398
  %v1413 = vsel %vm1385, %v1371, %v1399
  %v1414 = vsel %vm1386, %v1372, %v1400
  %v1415 = vsel %vm1387, %v1373, %v1401
  %v1416 = vsel %vm1388, %v1374, %v1402
  %v1417 = vsel %vm1389, %v1375, %v1403
  %v1418 = vsel %vm1390, %v1376, %v1404
  %v1419 = vsel %vm1391, %v1377, %v1405
  %v1420 = vld [vmem:[%s4] sm:$0xff]
  %v1421 = vld [vmem:[%s4 + $0x8] sm:$0xff]
  %v1422 = vld [vmem:[%s4 + $0x10] sm:$0xff]
  %v1423 = vld [vmem:[%s4 + $0x18] sm:$0xff]
  %v1424 = vld [vmem:[%s4 + $0x20] sm:$0xff]
  %v1425 = vld [vmem:[%s4 + $0x28] sm:$0xff]
  %v1426 = vld [vmem:[%s4 + $0x30] sm:$0xff]
  %v1427 = vmul.f32 %v1406, %v1420
  %v1428 = vmul.f32 %v1407, %v1421
  %v1429 = vmul.f32 %v1408, %v1422
  %v1430 = vmul.f32 %v1409, %v1423
  %v1431 = vmul.f32 %v1410, %v1424
  %v1432 = vmul.f32 %v1411, %v1425
  %v1433 = vmul.f32 %v1412, %v1426
  %v1434 = vmul.f32 %v1413, %v1420
  %v1435 = vmul.f32 %v1414, %v1421
  %v1436 = vmul.f32 %v1415, %v1422
  %v1437 = vmul.f32 %v1416, %v1423
  %v1438 = vmul.f32 %v1417, %v1424
  %v1439 = vmul.f32 %v1418, %v1425
  %v1440 = vmul.f32 %v1419, %v1426
  %v1441 = vadd.f32 %v1427, %v1428
  %v1442 = vadd.f32 %v1441, %v1429
  %v1443 = vadd.f32 %v1442, %v1430
  %v1444 = vadd.f32 %v1443, %v1431
  %v1445 = vadd.f32 %v1444, %v1432
  %v1446 = vadd.f32 %v1445, %v1433
  %v1447 = vrot.slane %v1446, 4
  %v1448 = vadd.f32 %v1446, %v1447
  %v1449 = vrot.slane %v1448, 2
  %v1450 = vadd.f32 %v1448, %v1449
  %v1451 = vrot.slane %v1450, 1
  %v1452 = vadd.f32 %v1450, %v1451
  %v1453 = vadd.f32 %v1434, %v1435
  %v1454 = vadd.f32 %v1453, %v1436
  %v1455 = vadd.f32 %v1454, %v1437
  %v1456 = vadd.f32 %v1455, %v1438
  %v1457 = vadd.f32 %v1456, %v1439
  %v1458 = vadd.f32 %v1457, %v1440
  %v1459 = vrot.slane %v1458, 4
  %v1460 = vadd.f32 %v1458, %v1459
  %v1461 = vrot.slane %v1460, 2
  %v1462 = vadd.f32 %v1460, %v1461
  %v1463 = vrot.slane %v1462, 1
  %v1464 = vadd.f32 %v1462, %v1463
  %vm1467 = vcmask 1041409
  %v1468 = vsel %vm1467, %v1464, %v1452
  %1470 = vst [vmem:[%s5] sm:$0x3] %v1468
  // Predicated region
  $region22: #{discriminator_forward.3} parent=0 // pred_check
    _
  $region23: #{discriminator_forward.3} parent=0 // pred_check_branch
    %1472 = sbr.rel (0) target = $region25
  $region24: #{discriminator_forward.3} parent=0 // pred_region
    _
  $region25: #{discriminator_forward.3} parent=0 // pred_fallthru
    _
  // Predicated region
  $region26: #{discriminator_forward.3} parent=0 // pred_check
    _
  $region27: #{discriminator_forward.3} parent=0 // pred_check_branch
    %1474 = sbr.rel (0) target = $region29
  $region28: #{discriminator_forward.3} parent=0 // pred_region
    _
  $region29: #{discriminator_forward.3} parent=0 // pred_fallthru
    _

</llo_original>
